<compile_context>
chip_gen: v7x
topology: tpu7x:2x2x1
jax: 0.10.0
libtpu: 0.0.40
codegen_flags: <defaults>
</compile_context>

<pallas_src>
import math

import jax
import jax.numpy as jnp
import numpy as np
from jax.experimental import pallas as pl
from jax.experimental.pallas import tpu as pltpu

# ---------------- small synthetic config (shapes consistent with the module) ----
BATCH = 2
EMBED_DIM = 32
INTERMEDIATE = 64
NUM_LAYERS = 2
NUM_HEADS = 4
HEAD_DIM = EMBED_DIM // NUM_HEADS
NUM_CHANNELS = 3
IMAGE_SIZE = 16
PATCH_SIZE = 4
NUM_PATCHES = (IMAGE_SIZE // PATCH_SIZE) ** 2             # 16
PATCH_K = NUM_CHANNELS * PATCH_SIZE * PATCH_SIZE          # 48
EPS = 1e-6
SCALE = HEAD_DIM ** -0.5
_GELU_C = math.sqrt(2.0 / math.pi)


# ------------------------------ kernel helpers ---------------------------------
def _layer_norm(x, g, b):
    mu = jnp.mean(x, axis=-1, keepdims=True)
    var = jnp.mean(jnp.square(x - mu), axis=-1, keepdims=True)
    # rsqrt = single EUP op (idle slot) instead of a multi-op VPU divide.
    return (x - mu) * jax.lax.rsqrt(var + EPS) * g + b


def _gelu_tanh(x):
    return 0.5 * x * (1.0 + jnp.tanh(_GELU_C * (x + 0.044715 * x * x * x)))


# ------------------------------- fused kernel ----------------------------------
def _siglip_fused_kernel(
        patches_ref,                       # (N, K)    im2col patches, one image
        pw_ref,                            # (K, D)    patch-embedding weight
        posb_ref,                          # (N, D)    patch bias + pos emb (pre-combined)
        ln1g_ref, ln1b_ref,                # (1, D)
        wqkv_ref, bqkv_ref,                # (D, 3D) / (1, 3D)   fused Q|K|V
        wo_ref, bo_ref,                    # (D, D)  / (1, D)
        ln2g_ref, ln2b_ref,                # (1, D)
        w1_ref, b1_ref,                    # (D, I)  / (1, I)
        w2_ref, b2_ref,                    # (I, D)  / (1, D)
        lnfg_ref, lnfb_ref,                # (1, D)
        out_ref):                          # (N, D)
    # ---- patch embedding (Conv2d as im2col matmul) + position embedding ----
    x0 = jnp.dot(patches_ref[...], pw_ref[...],
                 preferred_element_type=jnp.float32) + posb_ref[...]

    # ---- encoder layer: attention block (pre-LN) ----
    h = _layer_norm(x0, ln1g_ref[...], ln1b_ref[...])
    qkv = jnp.dot(h, wqkv_ref[...],
                  preferred_element_type=jnp.float32) + bqkv_ref[...]     # (N, 3D)
    q = qkv[:, 0 * EMBED_DIM:1 * EMBED_DIM]
    k = qkv[:, 1 * EMBED_DIM:2 * EMBED_DIM]
    v = qkv[:, 2 * EMBED_DIM:3 * EMBED_DIM]

    # contract last dims of q and k (q @ k^T) -> no explicit transpose op
    dn = (((1,), (1,)), ((), ()))
    ctx_heads = []
    for hi in range(NUM_HEADS):
        sl = slice(hi * HEAD_DIM, (hi + 1) * HEAD_DIM)
        qh, kh, vh = q[:, sl], k[:, sl], v[:, sl]
        s = jax.lax.dot_general(qh, kh, dn,
                                preferred_element_type=jnp.float32) * SCALE
        s = s - jnp.max(s, axis=-1, keepdims=True)
        e = jnp.exp(s)
        p = e * pl.reciprocal(jnp.sum(e, axis=-1, keepdims=True), approx=True)
        ctx_heads.append(jnp.dot(p, vh, preferred_element_type=jnp.float32))
    ctx = jnp.concatenate(ctx_heads, axis=-1)          # (N, D) lane concat (XLU)
    attn = jnp.dot(ctx, wo_ref[...],
                   preferred_element_type=jnp.float32) + bo_ref[...]
    x1 = x0 + attn

    # ---- encoder layer: MLP block (pre-LN) ----
    h2 = _layer_norm(x1, ln2g_ref[...], ln2b_ref[...])
    m = jnp.dot(h2, w1_ref[...], preferred_element_type=jnp.float32) + b1_ref[...]
    m = _gelu_tanh(m)
    m = jnp.dot(m, w2_ref[...], preferred_element_type=jnp.float32) + b2_ref[...]
    x2 = x1 + m

    # ---- final LayerNorm ----
    # Output layout kept as-is: at 2 KB/step the masked store is cheaper than
    # any relayout; at production D (multiple of 128) it is lane-dense anyway.
    out_ref[...] = _layer_norm(x2, lnfg_ref[...], lnfb_ref[...])


# ------------------------------ wrappers ---------------------------------------
def _extract_patches(pixels):
    # NCHW -> [B, N, C*P*P]; equivalent to Conv2d(kernel=stride=P) im2col.
    B, C, H, W = pixels.shape
    Hp, Wp = H // PATCH_SIZE, W // PATCH_SIZE
    p = pixels.reshape(B, C, Hp, PATCH_SIZE, Wp, PATCH_SIZE)
    p = p.transpose(0, 2, 4, 1, 3, 5)
    return p.reshape(B, Hp * Wp, C * PATCH_SIZE * PATCH_SIZE)


def siglip_vision_transformer(pixels, params):
    B = pixels.shape[0]
    patches = _extract_patches(pixels)                          # (B, N, K)
    # Patch-conv bias and position embedding are both additive constants:
    # pre-combine once so the kernel adds a single (N, D) term.
    posb = params['patch_b'] + params['pos_emb']                # (N, D)

    # Reference-encoder semantics: every layer consumes `input_embeds`, so only
    # the LAST layer's output survives -> evaluate only that layer.
    lp = params['layers'][-1]
    wqkv = jnp.concatenate([lp['wq'], lp['wk'], lp['wv']], axis=1)   # (D, 3D)
    bqkv = jnp.concatenate([lp['bq'], lp['bk'], lp['bv']], axis=1)   # (1, 3D)

    args = (patches, params['patch_w'], posb,
            lp['ln1_g'], lp['ln1_b'],
            wqkv, bqkv,
            lp['wo'], lp['bo'],
            lp['ln2_g'], lp['ln2_b'],
            lp['w1'], lp['b1'], lp['w2'], lp['b2'],
            params['ln_g'], params['ln_b'])

    def _resident_spec(a):
        # Full-array block with a constant index map: stays VMEM-resident
        # across grid steps (no re-DMA).
        return pl.BlockSpec(a.shape, lambda b: tuple(0 for _ in a.shape))

    in_specs = [pl.BlockSpec((None, NUM_PATCHES, PATCH_K), lambda b: (b, 0, 0))]
    in_specs += [_resident_spec(a) for a in args[1:]]

    out = pl.pallas_call(
        _siglip_fused_kernel,
        out_shape=jax.ShapeDtypeStruct((B, NUM_PATCHES, EMBED_DIM), jnp.float32),
        grid=(B,),
        in_specs=in_specs,
        out_specs=pl.BlockSpec((None, NUM_PATCHES, EMBED_DIM), lambda b: (b, 0, 0)),
        compiler_params=pltpu.CompilerParams(
            dimension_semantics=("parallel",)),      # megacore split on v7x
    )(*args)
    return out


# -------------------------- deterministic parameter init -----------------------
def init_params(key):
    def nrm(shape, scale=0.02):
        nonlocal key
        key, sub = jax.random.split(key)
        return (scale * jax.random.normal(sub, shape)).astype(jnp.float32)

    params = {
        'patch_w': nrm((PATCH_K, EMBED_DIM)),
        'patch_b': nrm((1, EMBED_DIM)),
        'pos_emb': nrm((NUM_PATCHES, EMBED_DIM)),
        'ln_g': jnp.ones((1, EMBED_DIM), jnp.float32),
        'ln_b': jnp.zeros((1, EMBED_DIM), jnp.float32),
        'layers': [],
    }
    for _ in range(NUM_LAYERS):
        lp = {
            'ln1_g': jnp.ones((1, EMBED_DIM), jnp.float32),
            'ln1_b': jnp.zeros((1, EMBED_DIM), jnp.float32),
            'wq': nrm((EMBED_DIM, EMBED_DIM)), 'bq': nrm((1, EMBED_DIM)),
            'wk': nrm((EMBED_DIM, EMBED_DIM)), 'bk': nrm((1, EMBED_DIM)),
            'wv': nrm((EMBED_DIM, EMBED_DIM)), 'bv': nrm((1, EMBED_DIM)),
            'wo': nrm((EMBED_DIM, EMBED_DIM)), 'bo': nrm((1, EMBED_DIM)),
            'ln2_g': jnp.ones((1, EMBED_DIM), jnp.float32),
            'ln2_b': jnp.zeros((1, EMBED_DIM), jnp.float32),
            'w1': nrm((EMBED_DIM, INTERMEDIATE)), 'b1': nrm((1, INTERMEDIATE)),
            'w2': nrm((INTERMEDIATE, EMBED_DIM)), 'b2': nrm((1, EMBED_DIM)),
        }
        params['layers'].append(lp)
    return params


# ------------------------------- pure-JAX reference -----------------------------
_HI = jax.lax.Precision.HIGHEST


def ref_forward(pixels, params):
    def mm(a, b):
        return jnp.matmul(a, b, precision=_HI)

    def ln(v, g, b):
        mu = v.mean(-1, keepdims=True)
        var = ((v - mu) ** 2).mean(-1, keepdims=True)
        return (v - mu) / jnp.sqrt(var + EPS) * g + b

    patches = _extract_patches(pixels)
    x = mm(patches, params['patch_w']) + params['patch_b'] + params['pos_emb']
    B, N, D = x.shape

    out = x
    for lp in params['layers']:      # reference bug reproduced: every layer sees `x`
        h = ln(x, lp['ln1_g'], lp['ln1_b'])
        q = (mm(h, lp['wq']) + lp['bq']).reshape(B, N, NUM_HEADS, HEAD_DIM).transpose(0, 2, 1, 3)
        k = (mm(h, lp['wk']) + lp['bk']).reshape(B, N, NUM_HEADS, HEAD_DIM).transpose(0, 2, 1, 3)
        v = (mm(h, lp['wv']) + lp['bv']).reshape(B, N, NUM_HEADS, HEAD_DIM).transpose(0, 2, 1, 3)
        s = jnp.einsum('bhqd,bhkd->bhqk', q, k, precision=_HI) * SCALE
        p = jax.nn.softmax(s, axis=-1)
        o = jnp.einsum('bhqk,bhkd->bhqd', p, v, precision=_HI)
        o = o.transpose(0, 2, 1, 3).reshape(B, N, D)
        o = mm(o, lp['wo']) + lp['bo']
        x1 = x + o
        h2 = ln(x1, lp['ln2_g'], lp['ln2_b'])
        z = mm(h2, lp['w1']) + lp['b1']
        m = 0.5 * z * (1.0 + jnp.tanh(_GELU_C * (z + 0.044715 * z ** 3)))
        m = mm(m, lp['w2']) + lp['b2']
        out = x1 + m
    return ln(out, params['ln_g'], params['ln_b'])


# ----------------------------------- main ---------------------------------------
if __name__ == "__main__":
    key = jax.random.PRNGKey(0)
    pkey, xkey = jax.random.split(key)
    params = init_params(pkey)
    pixels = jax.random.normal(
        xkey, (BATCH, NUM_CHANNELS, IMAGE_SIZE, IMAGE_SIZE), dtype=jnp.float32)

    out = siglip_vision_transformer(pixels, params)
    out = jax.block_until_ready(out)
    assert out.shape == (BATCH, NUM_PATCHES, EMBED_DIM), out.shape

    ref = ref_forward(pixels, params)
    np.testing.assert_allclose(np.asarray(out), np.asarray(ref),
                               atol=2e-3, rtol=2e-3)
    print("KERNEL_OK")
</pallas_src>

<mosaic_0001>
module attributes {stable_mosaic.version = 11 : i64} {
  func.func @_siglip_fused_kernel(%arg0: i32, %arg1: memref<1x16x48xf32, #tpu.memory_space<vmem>>, %arg2: memref<48x32xf32, #tpu.memory_space<vmem>>, %arg3: memref<16x32xf32, #tpu.memory_space<vmem>>, %arg4: memref<1x32xf32, #tpu.memory_space<vmem>>, %arg5: memref<1x32xf32, #tpu.memory_space<vmem>>, %arg6: memref<32x96xf32, #tpu.memory_space<vmem>>, %arg7: memref<1x96xf32, #tpu.memory_space<vmem>>, %arg8: memref<32x32xf32, #tpu.memory_space<vmem>>, %arg9: memref<1x32xf32, #tpu.memory_space<vmem>>, %arg10: memref<1x32xf32, #tpu.memory_space<vmem>>, %arg11: memref<1x32xf32, #tpu.memory_space<vmem>>, %arg12: memref<32x64xf32, #tpu.memory_space<vmem>>, %arg13: memref<1x64xf32, #tpu.memory_space<vmem>>, %arg14: memref<64x32xf32, #tpu.memory_space<vmem>>, %arg15: memref<1x32xf32, #tpu.memory_space<vmem>>, %arg16: memref<1x32xf32, #tpu.memory_space<vmem>>, %arg17: memref<1x32xf32, #tpu.memory_space<vmem>>, %arg18: memref<1x16x32xf32, #tpu.memory_space<vmem>>) attributes {dimension_semantics = [#tpu.dimension_semantics<parallel>], iteration_bounds = array<i64: 2>, scalar_prefetch = 0 : i64, scratch_operands = 0 : i64, tpu.core_type = #tpu.core_type<tc>, window_params = [{transform_indices = @transform_0, window_bounds = array<i64: 1, 16, 48>}, {pipeline_mode = #tpu.pipeline_mode<synchronous>, transform_indices = @transform_1, window_bounds = array<i64: 48, 32>}, {pipeline_mode = #tpu.pipeline_mode<synchronous>, transform_indices = @transform_2, window_bounds = array<i64: 16, 32>}, {pipeline_mode = #tpu.pipeline_mode<synchronous>, transform_indices = @transform_3, window_bounds = array<i64: 1, 32>}, {pipeline_mode = #tpu.pipeline_mode<synchronous>, transform_indices = @transform_4, window_bounds = array<i64: 1, 32>}, {pipeline_mode = #tpu.pipeline_mode<synchronous>, transform_indices = @transform_5, window_bounds = array<i64: 32, 96>}, {pipeline_mode = #tpu.pipeline_mode<synchronous>, transform_indices = @transform_6, window_bounds = array<i64: 1, 96>}, {pipeline_mode = #tpu.pipeline_mode<synchronous>, transform_indices = @transform_7, window_bounds = array<i64: 32, 32>}, {pipeline_mode = #tpu.pipeline_mode<synchronous>, transform_indices = @transform_8, window_bounds = array<i64: 1, 32>}, {pipeline_mode = #tpu.pipeline_mode<synchronous>, transform_indices = @transform_9, window_bounds = array<i64: 1, 32>}, {pipeline_mode = #tpu.pipeline_mode<synchronous>, transform_indices = @transform_10, window_bounds = array<i64: 1, 32>}, {pipeline_mode = #tpu.pipeline_mode<synchronous>, transform_indices = @transform_11, window_bounds = array<i64: 32, 64>}, {pipeline_mode = #tpu.pipeline_mode<synchronous>, transform_indices = @transform_12, window_bounds = array<i64: 1, 64>}, {pipeline_mode = #tpu.pipeline_mode<synchronous>, transform_indices = @transform_13, window_bounds = array<i64: 64, 32>}, {pipeline_mode = #tpu.pipeline_mode<synchronous>, transform_indices = @transform_14, window_bounds = array<i64: 1, 32>}, {pipeline_mode = #tpu.pipeline_mode<synchronous>, transform_indices = @transform_15, window_bounds = array<i64: 1, 32>}, {pipeline_mode = #tpu.pipeline_mode<synchronous>, transform_indices = @transform_16, window_bounds = array<i64: 1, 32>}, {transform_indices = @transform_17, window_bounds = array<i64: 1, 16, 32>}]} {
    %c0 = arith.constant 0 : index
    %c0_0 = arith.constant 0 : index
    %c0_1 = arith.constant 0 : index
    %0 = vector.load %arg1[%c0, %c0_0, %c0_1] : memref<1x16x48xf32, #tpu.memory_space<vmem>>, vector<1x16x48xf32>
    %1 = vector.shape_cast %0 : vector<1x16x48xf32> to vector<16x48xf32>
    %c0_2 = arith.constant 0 : index
    %c0_3 = arith.constant 0 : index
    %2 = vector.load %arg2[%c0_2, %c0_3] : memref<48x32xf32, #tpu.memory_space<vmem>>, vector<48x32xf32>
    %cst = arith.constant dense<0.000000e+00> : vector<16x32xf32>
    %3 = tpu.matmul %1, %2, %cst {dimension_numbers = #tpu.dot_dimension_numbers<[1], [0], [0], [1], [0, 0, 1, 1], [], []>} : vector<16x48xf32>, vector<48x32xf32>, vector<16x32xf32> -> vector<16x32xf32>
    %c0_4 = arith.constant 0 : index
    %c0_5 = arith.constant 0 : index
    %4 = vector.load %arg3[%c0_4, %c0_5] : memref<16x32xf32, #tpu.memory_space<vmem>>, vector<16x32xf32>
    %5 = arith.addf %3, %4 : vector<16x32xf32>
    %c0_6 = arith.constant 0 : index
    %c0_7 = arith.constant 0 : index
    %6 = vector.load %arg4[%c0_6, %c0_7] : memref<1x32xf32, #tpu.memory_space<vmem>>, vector<1x32xf32>
    %c0_8 = arith.constant 0 : index
    %c0_9 = arith.constant 0 : index
    %7 = vector.load %arg5[%c0_8, %c0_9] : memref<1x32xf32, #tpu.memory_space<vmem>>, vector<1x32xf32>
    %cst_10 = arith.constant dense<0.000000e+00> : vector<16xf32>
    %8 = vector.multi_reduction <add>, %5, %cst_10 [1] : vector<16x32xf32> to vector<16xf32>
    %9 = vector.shape_cast %8 : vector<16xf32> to vector<16x1xf32>
    %cst_11 = arith.constant 3.200000e+01 : f32
    %10 = vector.broadcast %cst_11 : f32 to vector<16x1xf32>
    %11 = arith.divf %9, %10 : vector<16x1xf32>
    %12 = vector.broadcast %11 : vector<16x1xf32> to vector<16x32xf32>
    %13 = arith.subf %5, %12 : vector<16x32xf32>
    %14 = arith.mulf %13, %13 : vector<16x32xf32>
    %cst_12 = arith.constant dense<0.000000e+00> : vector<16xf32>
    %15 = vector.multi_reduction <add>, %14, %cst_12 [1] : vector<16x32xf32> to vector<16xf32>
    %16 = vector.shape_cast %15 : vector<16xf32> to vector<16x1xf32>
    %cst_13 = arith.constant 3.200000e+01 : f32
    %17 = vector.broadcast %cst_13 : f32 to vector<16x1xf32>
    %18 = arith.divf %16, %17 : vector<16x1xf32>
    %19 = vector.broadcast %11 : vector<16x1xf32> to vector<16x32xf32>
    %20 = arith.subf %5, %19 : vector<16x32xf32>
    %cst_14 = arith.constant 9.99999997E-7 : f32
    %21 = vector.broadcast %cst_14 : f32 to vector<16x1xf32>
    %22 = arith.addf %18, %21 : vector<16x1xf32>
    %23 = math.rsqrt %22 : vector<16x1xf32>
    %24 = vector.broadcast %23 : vector<16x1xf32> to vector<16x32xf32>
    %25 = arith.mulf %20, %24 : vector<16x32xf32>
    %26 = vector.broadcast %6 : vector<1x32xf32> to vector<16x32xf32>
    %27 = arith.mulf %25, %26 : vector<16x32xf32>
    %28 = vector.broadcast %7 : vector<1x32xf32> to vector<16x32xf32>
    %29 = arith.addf %27, %28 : vector<16x32xf32>
    %c0_15 = arith.constant 0 : index
    %c0_16 = arith.constant 0 : index
    %30 = vector.load %arg6[%c0_15, %c0_16] : memref<32x96xf32, #tpu.memory_space<vmem>>, vector<32x96xf32>
    %cst_17 = arith.constant dense<0.000000e+00> : vector<16x96xf32>
    %31 = tpu.matmul %29, %30, %cst_17 {dimension_numbers = #tpu.dot_dimension_numbers<[1], [0], [0], [1], [0, 0, 1, 1], [], []>} : vector<16x32xf32>, vector<32x96xf32>, vector<16x96xf32> -> vector<16x96xf32>
    %c0_18 = arith.constant 0 : index
    %c0_19 = arith.constant 0 : index
    %32 = vector.load %arg7[%c0_18, %c0_19] : memref<1x96xf32, #tpu.memory_space<vmem>>, vector<1x96xf32>
    %33 = vector.broadcast %32 : vector<1x96xf32> to vector<16x96xf32>
    %34 = arith.addf %31, %33 : vector<16x96xf32>
    %35 = vector.extract_strided_slice %34 {offsets = [0, 0], sizes = [16, 32], strides = [1, 1]} : vector<16x96xf32> to vector<16x32xf32>
    %36 = vector.extract_strided_slice %34 {offsets = [0, 32], sizes = [16, 32], strides = [1, 1]} : vector<16x96xf32> to vector<16x32xf32>
    %37 = vector.extract_strided_slice %34 {offsets = [0, 64], sizes = [16, 32], strides = [1, 1]} : vector<16x96xf32> to vector<16x32xf32>
    %38 = vector.extract_strided_slice %35 {offsets = [0, 0], sizes = [16, 8], strides = [1, 1]} : vector<16x32xf32> to vector<16x8xf32>
    %39 = vector.extract_strided_slice %36 {offsets = [0, 0], sizes = [16, 8], strides = [1, 1]} : vector<16x32xf32> to vector<16x8xf32>
    %40 = vector.extract_strided_slice %37 {offsets = [0, 0], sizes = [16, 8], strides = [1, 1]} : vector<16x32xf32> to vector<16x8xf32>
    %cst_20 = arith.constant dense<0.000000e+00> : vector<16x16xf32>
    %41 = tpu.matmul %38, %39, %cst_20 {dimension_numbers = #tpu.dot_dimension_numbers<[1], [1], [0], [0], [0, 0, 1, 0], [], []>} : vector<16x8xf32>, vector<16x8xf32>, vector<16x16xf32> -> vector<16x16xf32>
    %cst_21 = arith.constant 0.353553385 : f32
    %42 = vector.broadcast %cst_21 : f32 to vector<16x16xf32>
    %43 = arith.mulf %41, %42 : vector<16x16xf32>
    %cst_22 = arith.constant dense<0xFF800000> : vector<16xf32>
    %44 = vector.multi_reduction <maximumf>, %43, %cst_22 [1] : vector<16x16xf32> to vector<16xf32>
    %45 = vector.shape_cast %44 : vector<16xf32> to vector<16x1xf32>
    %46 = vector.broadcast %45 : vector<16x1xf32> to vector<16x16xf32>
    %47 = arith.subf %43, %46 : vector<16x16xf32>
    %48 = math.exp %47 : vector<16x16xf32>
    %cst_23 = arith.constant dense<0.000000e+00> : vector<16xf32>
    %49 = vector.multi_reduction <add>, %48, %cst_23 [1] : vector<16x16xf32> to vector<16xf32>
    %50 = vector.shape_cast %49 : vector<16xf32> to vector<16x1xf32>
    %51 = tpu.reciprocal %50 {approx = true} : vector<16x1xf32> -> vector<16x1xf32>
    %52 = vector.broadcast %51 : vector<16x1xf32> to vector<16x16xf32>
    %53 = arith.mulf %48, %52 : vector<16x16xf32>
    %cst_24 = arith.constant dense<0.000000e+00> : vector<16x8xf32>
    %54 = tpu.matmul %53, %40, %cst_24 {dimension_numbers = #tpu.dot_dimension_numbers<[1], [0], [0], [1], [0, 0, 1, 1], [], []>} : vector<16x16xf32>, vector<16x8xf32>, vector<16x8xf32> -> vector<16x8xf32>
    %55 = vector.extract_strided_slice %35 {offsets = [0, 8], sizes = [16, 8], strides = [1, 1]} : vector<16x32xf32> to vector<16x8xf32>
    %56 = vector.extract_strided_slice %36 {offsets = [0, 8], sizes = [16, 8], strides = [1, 1]} : vector<16x32xf32> to vector<16x8xf32>
    %57 = vector.extract_strided_slice %37 {offsets = [0, 8], sizes = [16, 8], strides = [1, 1]} : vector<16x32xf32> to vector<16x8xf32>
    %cst_25 = arith.constant dense<0.000000e+00> : vector<16x16xf32>
    %58 = tpu.matmul %55, %56, %cst_25 {dimension_numbers = #tpu.dot_dimension_numbers<[1], [1], [0], [0], [0, 0, 1, 0], [], []>} : vector<16x8xf32>, vector<16x8xf32>, vector<16x16xf32> -> vector<16x16xf32>
    %cst_26 = arith.constant 0.353553385 : f32
    %59 = vector.broadcast %cst_26 : f32 to vector<16x16xf32>
    %60 = arith.mulf %58, %59 : vector<16x16xf32>
    %cst_27 = arith.constant dense<0xFF800000> : vector<16xf32>
    %61 = vector.multi_reduction <maximumf>, %60, %cst_27 [1] : vector<16x16xf32> to vector<16xf32>
    %62 = vector.shape_cast %61 : vector<16xf32> to vector<16x1xf32>
    %63 = vector.broadcast %62 : vector<16x1xf32> to vector<16x16xf32>
    %64 = arith.subf %60, %63 : vector<16x16xf32>
    %65 = math.exp %64 : vector<16x16xf32>
    %cst_28 = arith.constant dense<0.000000e+00> : vector<16xf32>
    %66 = vector.multi_reduction <add>, %65, %cst_28 [1] : vector<16x16xf32> to vector<16xf32>
    %67 = vector.shape_cast %66 : vector<16xf32> to vector<16x1xf32>
    %68 = tpu.reciprocal %67 {approx = true} : vector<16x1xf32> -> vector<16x1xf32>
    %69 = vector.broadcast %68 : vector<16x1xf32> to vector<16x16xf32>
    %70 = arith.mulf %65, %69 : vector<16x16xf32>
    %cst_29 = arith.constant dense<0.000000e+00> : vector<16x8xf32>
    %71 = tpu.matmul %70, %57, %cst_29 {dimension_numbers = #tpu.dot_dimension_numbers<[1], [0], [0], [1], [0, 0, 1, 1], [], []>} : vector<16x16xf32>, vector<16x8xf32>, vector<16x8xf32> -> vector<16x8xf32>
    %72 = vector.extract_strided_slice %35 {offsets = [0, 16], sizes = [16, 8], strides = [1, 1]} : vector<16x32xf32> to vector<16x8xf32>
    %73 = vector.extract_strided_slice %36 {offsets = [0, 16], sizes = [16, 8], strides = [1, 1]} : vector<16x32xf32> to vector<16x8xf32>
    %74 = vector.extract_strided_slice %37 {offsets = [0, 16], sizes = [16, 8], strides = [1, 1]} : vector<16x32xf32> to vector<16x8xf32>
    %cst_30 = arith.constant dense<0.000000e+00> : vector<16x16xf32>
    %75 = tpu.matmul %72, %73, %cst_30 {dimension_numbers = #tpu.dot_dimension_numbers<[1], [1], [0], [0], [0, 0, 1, 0], [], []>} : vector<16x8xf32>, vector<16x8xf32>, vector<16x16xf32> -> vector<16x16xf32>
    %cst_31 = arith.constant 0.353553385 : f32
    %76 = vector.broadcast %cst_31 : f32 to vector<16x16xf32>
    %77 = arith.mulf %75, %76 : vector<16x16xf32>
    %cst_32 = arith.constant dense<0xFF800000> : vector<16xf32>
    %78 = vector.multi_reduction <maximumf>, %77, %cst_32 [1] : vector<16x16xf32> to vector<16xf32>
    %79 = vector.shape_cast %78 : vector<16xf32> to vector<16x1xf32>
    %80 = vector.broadcast %79 : vector<16x1xf32> to vector<16x16xf32>
    %81 = arith.subf %77, %80 : vector<16x16xf32>
    %82 = math.exp %81 : vector<16x16xf32>
    %cst_33 = arith.constant dense<0.000000e+00> : vector<16xf32>
    %83 = vector.multi_reduction <add>, %82, %cst_33 [1] : vector<16x16xf32> to vector<16xf32>
    %84 = vector.shape_cast %83 : vector<16xf32> to vector<16x1xf32>
    %85 = tpu.reciprocal %84 {approx = true} : vector<16x1xf32> -> vector<16x1xf32>
    %86 = vector.broadcast %85 : vector<16x1xf32> to vector<16x16xf32>
    %87 = arith.mulf %82, %86 : vector<16x16xf32>
    %cst_34 = arith.constant dense<0.000000e+00> : vector<16x8xf32>
    %88 = tpu.matmul %87, %74, %cst_34 {dimension_numbers = #tpu.dot_dimension_numbers<[1], [0], [0], [1], [0, 0, 1, 1], [], []>} : vector<16x16xf32>, vector<16x8xf32>, vector<16x8xf32> -> vector<16x8xf32>
    %89 = vector.extract_strided_slice %35 {offsets = [0, 24], sizes = [16, 8], strides = [1, 1]} : vector<16x32xf32> to vector<16x8xf32>
    %90 = vector.extract_strided_slice %36 {offsets = [0, 24], sizes = [16, 8], strides = [1, 1]} : vector<16x32xf32> to vector<16x8xf32>
    %91 = vector.extract_strided_slice %37 {offsets = [0, 24], sizes = [16, 8], strides = [1, 1]} : vector<16x32xf32> to vector<16x8xf32>
    %cst_35 = arith.constant dense<0.000000e+00> : vector<16x16xf32>
    %92 = tpu.matmul %89, %90, %cst_35 {dimension_numbers = #tpu.dot_dimension_numbers<[1], [1], [0], [0], [0, 0, 1, 0], [], []>} : vector<16x8xf32>, vector<16x8xf32>, vector<16x16xf32> -> vector<16x16xf32>
    %cst_36 = arith.constant 0.353553385 : f32
    %93 = vector.broadcast %cst_36 : f32 to vector<16x16xf32>
    %94 = arith.mulf %92, %93 : vector<16x16xf32>
    %cst_37 = arith.constant dense<0xFF800000> : vector<16xf32>
    %95 = vector.multi_reduction <maximumf>, %94, %cst_37 [1] : vector<16x16xf32> to vector<16xf32>
    %96 = vector.shape_cast %95 : vector<16xf32> to vector<16x1xf32>
    %97 = vector.broadcast %96 : vector<16x1xf32> to vector<16x16xf32>
    %98 = arith.subf %94, %97 : vector<16x16xf32>
    %99 = math.exp %98 : vector<16x16xf32>
    %cst_38 = arith.constant dense<0.000000e+00> : vector<16xf32>
    %100 = vector.multi_reduction <add>, %99, %cst_38 [1] : vector<16x16xf32> to vector<16xf32>
    %101 = vector.shape_cast %100 : vector<16xf32> to vector<16x1xf32>
    %102 = tpu.reciprocal %101 {approx = true} : vector<16x1xf32> -> vector<16x1xf32>
    %103 = vector.broadcast %102 : vector<16x1xf32> to vector<16x16xf32>
    %104 = arith.mulf %99, %103 : vector<16x16xf32>
    %cst_39 = arith.constant dense<0.000000e+00> : vector<16x8xf32>
    %105 = tpu.matmul %104, %91, %cst_39 {dimension_numbers = #tpu.dot_dimension_numbers<[1], [0], [0], [1], [0, 0, 1, 1], [], []>} : vector<16x16xf32>, vector<16x8xf32>, vector<16x8xf32> -> vector<16x8xf32>
    %106 = tpu.concatenate %54, %71, %88, %105 in 1 : vector<16x8xf32>, vector<16x8xf32>, vector<16x8xf32>, vector<16x8xf32> -> vector<16x32xf32>
    %c0_40 = arith.constant 0 : index
    %c0_41 = arith.constant 0 : index
    %107 = vector.load %arg8[%c0_40, %c0_41] : memref<32x32xf32, #tpu.memory_space<vmem>>, vector<32x32xf32>
    %cst_42 = arith.constant dense<0.000000e+00> : vector<16x32xf32>
    %108 = tpu.matmul %106, %107, %cst_42 {dimension_numbers = #tpu.dot_dimension_numbers<[1], [0], [0], [1], [0, 0, 1, 1], [], []>} : vector<16x32xf32>, vector<32x32xf32>, vector<16x32xf32> -> vector<16x32xf32>
    %c0_43 = arith.constant 0 : index
    %c0_44 = arith.constant 0 : index
    %109 = vector.load %arg9[%c0_43, %c0_44] : memref<1x32xf32, #tpu.memory_space<vmem>>, vector<1x32xf32>
    %110 = vector.broadcast %109 : vector<1x32xf32> to vector<16x32xf32>
    %111 = arith.addf %108, %110 : vector<16x32xf32>
    %112 = arith.addf %5, %111 : vector<16x32xf32>
    %c0_45 = arith.constant 0 : index
    %c0_46 = arith.constant 0 : index
    %113 = vector.load %arg10[%c0_45, %c0_46] : memref<1x32xf32, #tpu.memory_space<vmem>>, vector<1x32xf32>
    %c0_47 = arith.constant 0 : index
    %c0_48 = arith.constant 0 : index
    %114 = vector.load %arg11[%c0_47, %c0_48] : memref<1x32xf32, #tpu.memory_space<vmem>>, vector<1x32xf32>
    %cst_49 = arith.constant dense<0.000000e+00> : vector<16xf32>
    %115 = vector.multi_reduction <add>, %112, %cst_49 [1] : vector<16x32xf32> to vector<16xf32>
    %116 = vector.shape_cast %115 : vector<16xf32> to vector<16x1xf32>
    %cst_50 = arith.constant 3.200000e+01 : f32
    %117 = vector.broadcast %cst_50 : f32 to vector<16x1xf32>
    %118 = arith.divf %116, %117 : vector<16x1xf32>
    %119 = vector.broadcast %118 : vector<16x1xf32> to vector<16x32xf32>
    %120 = arith.subf %112, %119 : vector<16x32xf32>
    %121 = arith.mulf %120, %120 : vector<16x32xf32>
    %cst_51 = arith.constant dense<0.000000e+00> : vector<16xf32>
    %122 = vector.multi_reduction <add>, %121, %cst_51 [1] : vector<16x32xf32> to vector<16xf32>
    %123 = vector.shape_cast %122 : vector<16xf32> to vector<16x1xf32>
    %cst_52 = arith.constant 3.200000e+01 : f32
    %124 = vector.broadcast %cst_52 : f32 to vector<16x1xf32>
    %125 = arith.divf %123, %124 : vector<16x1xf32>
    %126 = vector.broadcast %118 : vector<16x1xf32> to vector<16x32xf32>
    %127 = arith.subf %112, %126 : vector<16x32xf32>
    %cst_53 = arith.constant 9.99999997E-7 : f32
    %128 = vector.broadcast %cst_53 : f32 to vector<16x1xf32>
    %129 = arith.addf %125, %128 : vector<16x1xf32>
    %130 = math.rsqrt %129 : vector<16x1xf32>
    %131 = vector.broadcast %130 : vector<16x1xf32> to vector<16x32xf32>
    %132 = arith.mulf %127, %131 : vector<16x32xf32>
    %133 = vector.broadcast %113 : vector<1x32xf32> to vector<16x32xf32>
    %134 = arith.mulf %132, %133 : vector<16x32xf32>
    %135 = vector.broadcast %114 : vector<1x32xf32> to vector<16x32xf32>
    %136 = arith.addf %134, %135 : vector<16x32xf32>
    %c0_54 = arith.constant 0 : index
    %c0_55 = arith.constant 0 : index
    %137 = vector.load %arg12[%c0_54, %c0_55] : memref<32x64xf32, #tpu.memory_space<vmem>>, vector<32x64xf32>
    %cst_56 = arith.constant dense<0.000000e+00> : vector<16x64xf32>
    %138 = tpu.matmul %136, %137, %cst_56 {dimension_numbers = #tpu.dot_dimension_numbers<[1], [0], [0], [1], [0, 0, 1, 1], [], []>} : vector<16x32xf32>, vector<32x64xf32>, vector<16x64xf32> -> vector<16x64xf32>
    %c0_57 = arith.constant 0 : index
    %c0_58 = arith.constant 0 : index
    %139 = vector.load %arg13[%c0_57, %c0_58] : memref<1x64xf32, #tpu.memory_space<vmem>>, vector<1x64xf32>
    %140 = vector.broadcast %139 : vector<1x64xf32> to vector<16x64xf32>
    %141 = arith.addf %138, %140 : vector<16x64xf32>
    %cst_59 = arith.constant 5.000000e-01 : f32
    %142 = vector.broadcast %cst_59 : f32 to vector<16x64xf32>
    %143 = arith.mulf %142, %141 : vector<16x64xf32>
    %cst_60 = arith.constant 4.471500e-02 : f32
    %144 = vector.broadcast %cst_60 : f32 to vector<16x64xf32>
    %145 = arith.mulf %144, %141 : vector<16x64xf32>
    %146 = arith.mulf %145, %141 : vector<16x64xf32>
    %147 = arith.mulf %146, %141 : vector<16x64xf32>
    %148 = arith.addf %141, %147 : vector<16x64xf32>
    %cst_61 = arith.constant 0.797884583 : f32
    %149 = vector.broadcast %cst_61 : f32 to vector<16x64xf32>
    %150 = arith.mulf %149, %148 : vector<16x64xf32>
    %151 = math.tanh %150 : vector<16x64xf32>
    %cst_62 = arith.constant 1.000000e+00 : f32
    %152 = vector.broadcast %cst_62 : f32 to vector<16x64xf32>
    %153 = arith.addf %152, %151 : vector<16x64xf32>
    %154 = arith.mulf %143, %153 : vector<16x64xf32>
    %c0_63 = arith.constant 0 : index
    %c0_64 = arith.constant 0 : index
    %155 = vector.load %arg14[%c0_63, %c0_64] : memref<64x32xf32, #tpu.memory_space<vmem>>, vector<64x32xf32>
    %cst_65 = arith.constant dense<0.000000e+00> : vector<16x32xf32>
    %156 = tpu.matmul %154, %155, %cst_65 {dimension_numbers = #tpu.dot_dimension_numbers<[1], [0], [0], [1], [0, 0, 1, 1], [], []>} : vector<16x64xf32>, vector<64x32xf32>, vector<16x32xf32> -> vector<16x32xf32>
    %c0_66 = arith.constant 0 : index
    %c0_67 = arith.constant 0 : index
    %157 = vector.load %arg15[%c0_66, %c0_67] : memref<1x32xf32, #tpu.memory_space<vmem>>, vector<1x32xf32>
    %158 = vector.broadcast %157 : vector<1x32xf32> to vector<16x32xf32>
    %159 = arith.addf %156, %158 : vector<16x32xf32>
    %160 = arith.addf %112, %159 : vector<16x32xf32>
    %c0_68 = arith.constant 0 : index
    %c0_69 = arith.constant 0 : index
    %161 = vector.load %arg16[%c0_68, %c0_69] : memref<1x32xf32, #tpu.memory_space<vmem>>, vector<1x32xf32>
    %c0_70 = arith.constant 0 : index
    %c0_71 = arith.constant 0 : index
    %162 = vector.load %arg17[%c0_70, %c0_71] : memref<1x32xf32, #tpu.memory_space<vmem>>, vector<1x32xf32>
    %cst_72 = arith.constant dense<0.000000e+00> : vector<16xf32>
    %163 = vector.multi_reduction <add>, %160, %cst_72 [1] : vector<16x32xf32> to vector<16xf32>
    %164 = vector.shape_cast %163 : vector<16xf32> to vector<16x1xf32>
    %cst_73 = arith.constant 3.200000e+01 : f32
    %165 = vector.broadcast %cst_73 : f32 to vector<16x1xf32>
    %166 = arith.divf %164, %165 : vector<16x1xf32>
    %167 = vector.broadcast %166 : vector<16x1xf32> to vector<16x32xf32>
    %168 = arith.subf %160, %167 : vector<16x32xf32>
    %169 = arith.mulf %168, %168 : vector<16x32xf32>
    %cst_74 = arith.constant dense<0.000000e+00> : vector<16xf32>
    %170 = vector.multi_reduction <add>, %169, %cst_74 [1] : vector<16x32xf32> to vector<16xf32>
    %171 = vector.shape_cast %170 : vector<16xf32> to vector<16x1xf32>
    %cst_75 = arith.constant 3.200000e+01 : f32
    %172 = vector.broadcast %cst_75 : f32 to vector<16x1xf32>
    %173 = arith.divf %171, %172 : vector<16x1xf32>
    %174 = vector.broadcast %166 : vector<16x1xf32> to vector<16x32xf32>
    %175 = arith.subf %160, %174 : vector<16x32xf32>
    %cst_76 = arith.constant 9.99999997E-7 : f32
    %176 = vector.broadcast %cst_76 : f32 to vector<16x1xf32>
    %177 = arith.addf %173, %176 : vector<16x1xf32>
    %178 = math.rsqrt %177 : vector<16x1xf32>
    %179 = vector.broadcast %178 : vector<16x1xf32> to vector<16x32xf32>
    %180 = arith.mulf %175, %179 : vector<16x32xf32>
    %181 = vector.broadcast %161 : vector<1x32xf32> to vector<16x32xf32>
    %182 = arith.mulf %180, %181 : vector<16x32xf32>
    %183 = vector.broadcast %162 : vector<1x32xf32> to vector<16x32xf32>
    %184 = arith.addf %182, %183 : vector<16x32xf32>
    %c0_77 = arith.constant 0 : index
    %c0_78 = arith.constant 0 : index
    %c0_79 = arith.constant 0 : index
    %185 = vector.load %arg18[%c0_77, %c0_78, %c0_79] : memref<1x16x32xf32, #tpu.memory_space<vmem>>, vector<1x16x32xf32>
    %186 = vector.shape_cast %185 : vector<1x16x32xf32> to vector<16x32xf32>
    %187 = vector.shape_cast %184 : vector<16x32xf32> to vector<1x16x32xf32>
    tpu.vector_store %arg18[%c0_77, %c0_78, %c0_79], %187 {strides = array<i32>} : memref<1x16x32xf32, #tpu.memory_space<vmem>>, vector<1x16x32xf32>,
    return
  }
  func.func @transform_0(%arg0: i32) -> (i32, i32, i32) {
    %c0_i32 = arith.constant 0 : i32
    %c0_i32_0 = arith.constant 0 : i32
    %c0_i32_1 = arith.constant 0 : i32
    return %arg0, %c0_i32, %c0_i32_0 : i32, i32, i32
  }
  func.func @transform_1(%arg0: i32) -> (i32, i32) {
    %c0_i32 = arith.constant 0 : i32
    %c0_i32_0 = arith.constant 0 : i32
    %c0_i32_1 = arith.constant 0 : i32
    return %c0_i32, %c0_i32_0 : i32, i32
  }
  func.func @transform_2(%arg0: i32) -> (i32, i32) {
    %c0_i32 = arith.constant 0 : i32
    %c0_i32_0 = arith.constant 0 : i32
    %c0_i32_1 = arith.constant 0 : i32
    return %c0_i32, %c0_i32_0 : i32, i32
  }
  func.func @transform_3(%arg0: i32) -> (i32, i32) {
    %c0_i32 = arith.constant 0 : i32
    %c0_i32_0 = arith.constant 0 : i32
    %c0_i32_1 = arith.constant 0 : i32
    return %c0_i32, %c0_i32_0 : i32, i32
  }
  func.func @transform_4(%arg0: i32) -> (i32, i32) {
    %c0_i32 = arith.constant 0 : i32
    %c0_i32_0 = arith.constant 0 : i32
    %c0_i32_1 = arith.constant 0 : i32
    return %c0_i32, %c0_i32_0 : i32, i32
  }
  func.func @transform_5(%arg0: i32) -> (i32, i32) {
    %c0_i32 = arith.constant 0 : i32
    %c0_i32_0 = arith.constant 0 : i32
    %c0_i32_1 = arith.constant 0 : i32
    return %c0_i32, %c0_i32_0 : i32, i32
  }
  func.func @transform_6(%arg0: i32) -> (i32, i32) {
    %c0_i32 = arith.constant 0 : i32
    %c0_i32_0 = arith.constant 0 : i32
    %c0_i32_1 = arith.constant 0 : i32
    return %c0_i32, %c0_i32_0 : i32, i32
  }
  func.func @transform_7(%arg0: i32) -> (i32, i32) {
    %c0_i32 = arith.constant 0 : i32
    %c0_i32_0 = arith.constant 0 : i32
    %c0_i32_1 = arith.constant 0 : i32
    return %c0_i32, %c0_i32_0 : i32, i32
  }
  func.func @transform_8(%arg0: i32) -> (i32, i32) {
    %c0_i32 = arith.constant 0 : i32
    %c0_i32_0 = arith.constant 0 : i32
    %c0_i32_1 = arith.constant 0 : i32
    return %c0_i32, %c0_i32_0 : i32, i32
  }
  func.func @transform_9(%arg0: i32) -> (i32, i32) {
    %c0_i32 = arith.constant 0 : i32
    %c0_i32_0 = arith.constant 0 : i32
    %c0_i32_1 = arith.constant 0 : i32
    return %c0_i32, %c0_i32_0 : i32, i32
  }
  func.func @transform_10(%arg0: i32) -> (i32, i32) {
    %c0_i32 = arith.constant 0 : i32
    %c0_i32_0 = arith.constant 0 : i32
    %c0_i32_1 = arith.constant 0 : i32
    return %c0_i32, %c0_i32_0 : i32, i32
  }
  func.func @transform_11(%arg0: i32) -> (i32, i32) {
    %c0_i32 = arith.constant 0 : i32
    %c0_i32_0 = arith.constant 0 : i32
    %c0_i32_1 = arith.constant 0 : i32
    return %c0_i32, %c0_i32_0 : i32, i32
  }
  func.func @transform_12(%arg0: i32) -> (i32, i32) {
    %c0_i32 = arith.constant 0 : i32
    %c0_i32_0 = arith.constant 0 : i32
    %c0_i32_1 = arith.constant 0 : i32
    return %c0_i32, %c0_i32_0 : i32, i32
  }
  func.func @transform_13(%arg0: i32) -> (i32, i32) {
    %c0_i32 = arith.constant 0 : i32
    %c0_i32_0 = arith.constant 0 : i32
    %c0_i32_1 = arith.constant 0 : i32
    return %c0_i32, %c0_i32_0 : i32, i32
  }
  func.func @transform_14(%arg0: i32) -> (i32, i32) {
    %c0_i32 = arith.constant 0 : i32
    %c0_i32_0 = arith.constant 0 : i32
    %c0_i32_1 = arith.constant 0 : i32
    return %c0_i32, %c0_i32_0 : i32, i32
  }
  func.func @transform_15(%arg0: i32) -> (i32, i32) {
    %c0_i32 = arith.constant 0 : i32
    %c0_i32_0 = arith.constant 0 : i32
    %c0_i32_1 = arith.constant 0 : i32
    return %c0_i32, %c0_i32_0 : i32, i32
  }
  func.func @transform_16(%arg0: i32) -> (i32, i32) {
    %c0_i32 = arith.constant 0 : i32
    %c0_i32_0 = arith.constant 0 : i32
    %c0_i32_1 = arith.constant 0 : i32
    return %c0_i32, %c0_i32_0 : i32, i32
  }
  func.func @transform_17(%arg0: i32) -> (i32, i32, i32) {
    %c0_i32 = arith.constant 0 : i32
    %c0_i32_0 = arith.constant 0 : i32
    %c0_i32_1 = arith.constant 0 : i32
    return %arg0, %c0_i32, %c0_i32_0 : i32, i32, i32
  }
}

</mosaic_0001>

<llo_original>
// kernel: tpu_custom_call.1
$region0: #{tpu_custom_call.1}
  #allocation0 [shape = 'u32[]', space=smem, size = 0x4, offset = 0x4, fixed_abs, tag = 'smem constant byte address 0x4 - core index']
  #allocation1 [shape = 'u32[144,128]{1,0:T(1,128)}', space=vmem, size = 0x12000, scoped, tag = 'internal scratch']
  %s0 = inlined_call_operand.vmem [shape: f32[2,16,48], index: 0, kind: input, shape index: {}]
  %s1 = inlined_call_operand.vmem [shape: f32[48,32], index: 1, kind: input, shape index: {}]
  %s2 = inlined_call_operand.vmem [shape: f32[16,32], index: 2, kind: input, shape index: {}]
  %s3 = inlined_call_operand.vmem [shape: f32[1,32], index: 3, kind: input, shape index: {}]
  %s4 = inlined_call_operand.vmem [shape: f32[1,32], index: 4, kind: input, shape index: {}]
  %s5 = inlined_call_operand.vmem [shape: f32[32,96], index: 5, kind: input, shape index: {}]
  %s6 = inlined_call_operand.vmem [shape: f32[1,96], index: 6, kind: input, shape index: {}]
  %s7 = inlined_call_operand.vmem [shape: f32[32,32], index: 7, kind: input, shape index: {}]
  %s8 = inlined_call_operand.vmem [shape: f32[1,32], index: 8, kind: input, shape index: {}]
  %s9 = inlined_call_operand.vmem [shape: f32[1,32], index: 9, kind: input, shape index: {}]
  %s10 = inlined_call_operand.vmem [shape: f32[1,32], index: 10, kind: input, shape index: {}]
  %s11 = inlined_call_operand.vmem [shape: f32[32,64], index: 11, kind: input, shape index: {}]
  %s12 = inlined_call_operand.vmem [shape: f32[1,64], index: 12, kind: input, shape index: {}]
  %s13 = inlined_call_operand.vmem [shape: f32[64,32], index: 13, kind: input, shape index: {}]
  %s14 = inlined_call_operand.vmem [shape: f32[1,32], index: 14, kind: input, shape index: {}]
  %s15 = inlined_call_operand.vmem [shape: f32[1,32], index: 15, kind: input, shape index: {}]
  %s16 = inlined_call_operand.vmem [shape: f32[1,32], index: 16, kind: input, shape index: {}]
  %s17 = inlined_call_operand.hbm [shape: f32[2,16,32], index: 17, kind: output, shape index: {}]
  %s18 = sld [smem:[#allocation0]]
  $region101: #{tpu_custom_call.1} parent=0
    _
  %s20 = ssub.s32 1, %s18
  %s21 = scalar_select 0, %s20, %s18
  $region1: #{tpu_custom_call.1} parent=0
    #allocation2 [shape = 'u8[16384]{0}', space=vmem, size = 0x4000, scoped, tag = 'output window, operand 0']
    #allocation3 [shape = 's32[2]{0}', space=sflag, size = 0x8, scoped, tag = 'scoped memory for tpu_custom_call.1']
    %22 = vsyncpa [#allocation3], 0
    %s23 = scalar_lea.sflag [#allocation3], 1
    %24 = vsyncpa %s23, 0
    loop: start=0, step=1, limit=4
    $region2: #{tpu_custom_call.1} parent=1 // loop_pre_header
      _
    $region3: #{tpu_custom_call.1} parent=1 // loop_header
      %s26 = sphi 0, %s30
      %p27 = scmp.ge.s32.totalorder %s26, 4
      %s36 = sphi 0, %s38
      %s39 = sphi 0, %s36
      %s40 = sphi 0, %s39
      %s56 = sphi 0, %s40
      %s60 = sphi 0, %s60
      %s62 = sphi 0, %s60
      %s63 = sphi 0, %s62
      %s77 = sphi 0, %s63
      %s81 = sphi 0, %s81
      %s83 = sphi 0, %s81
      %s84 = sphi 0, %s83
      %s98 = sphi 0, %s84
      %s102 = sphi 0, %s102
      %s104 = sphi 0, %s102
      %s105 = sphi 0, %s104
      %s119 = sphi 0, %s105
      %s123 = sphi 0, %s123
      %s125 = sphi 0, %s123
      %s126 = sphi 0, %s125
      %s140 = sphi 0, %s126
      %s144 = sphi 0, %s144
      %s146 = sphi 0, %s144
      %s147 = sphi 0, %s146
      %s161 = sphi 0, %s147
      %s165 = sphi 0, %s165
      %s167 = sphi 0, %s165
      %s168 = sphi 0, %s167
      %s182 = sphi 0, %s168
      %s186 = sphi 0, %s186
      %s188 = sphi 0, %s186
      %s189 = sphi 0, %s188
      %s203 = sphi 0, %s189
      %s207 = sphi 0, %s207
      %s209 = sphi 0, %s207
      %s210 = sphi 0, %s209
      %s224 = sphi 0, %s210
      %s228 = sphi 0, %s228
      %s230 = sphi 0, %s228
      %s231 = sphi 0, %s230
      %s245 = sphi 0, %s231
      %s249 = sphi 0, %s249
      %s251 = sphi 0, %s249
      %s252 = sphi 0, %s251
      %s266 = sphi 0, %s252
      %s270 = sphi 0, %s270
      %s272 = sphi 0, %s270
      %s273 = sphi 0, %s272
      %s287 = sphi 0, %s273
      %s291 = sphi 0, %s291
      %s293 = sphi 0, %s291
      %s294 = sphi 0, %s293
      %s308 = sphi 0, %s294
      %s312 = sphi 0, %s312
      %s314 = sphi 0, %s312
      %s315 = sphi 0, %s314
      %s329 = sphi 0, %s315
      %s333 = sphi 0, %s333
      %s335 = sphi 0, %s333
      %s336 = sphi 0, %s335
      %s350 = sphi 0, %s336
      %s354 = sphi 0, %s354
      %s356 = sphi 0, %s354
      %s357 = sphi 0, %s356
      %s371 = sphi 0, %s357
      %s375 = sphi 0, %s375
      %s377 = sphi 0, %s375
      %s378 = sphi 0, %s377
      %s392 = sphi 0, %s378
      %s398 = sphi 0, %s400
      %s401 = sphi 0, %s398
      %s402 = sphi 0, %s401
      %s418 = sphi 0, %s402
    $region4: #{tpu_custom_call.1} parent=1 // loop_header_branch
      %29 = sbr.rel (%p27) target = $region8
    $region5: #{tpu_custom_call.1} parent=1 // loop_body
      %s31 = ssub.s32 %s26, 1
      %s32 = ssub.s32 %s26, 2
      %s33 = sadd.s32 %s26, 1
      %s34 = ssub.s32 %s26, %s33
      %p35 = scmp.eq.s32.totalorder %s34, 0
      %s37 = sadd.s32 %s36, 1
      %s38 = scalar_select %p35, %s36, %s37
      %p41 = pneg %p35
      %p42 = scmp.eq.s32.totalorder %s26, 1
      %p43 = por %p41, %p42
      %p44 = scmp.ne.s32.totalorder %s36, %s39
      %p45 = scmp.eq.s32.totalorder %s26, 0
      %p46 = por %p44, %p45
      %p47 = scmp.ne.s32.totalorder %s36, %s39
      %p48 = scmp.eq.s32.totalorder %s31, 1
      %p49 = por %p47, %p48
      %p50 = scmp.ne.s32.totalorder %s39, %s40
      %p51 = scmp.eq.s32.totalorder %s31, 0
      %p52 = por %p50, %p51
      %p53 = scmp.ne.s32.totalorder %s39, %s40
      %p54 = scmp.eq.s32.totalorder %s32, 1
      %p55 = por %p53, %p54
      %p57 = scmp.ne.s32.totalorder %s40, %s56
      %p58 = scmp.eq.s32.totalorder %s32, 0
      %p59 = por %p57, %p58
      %s61 = sadd.s32 %s60, 1
      %p64 = scmp.eq.s32.totalorder %s26, 1
      %p65 = scmp.ne.s32.totalorder %s60, %s62
      %p66 = scmp.eq.s32.totalorder %s26, 0
      %p67 = por %p65, %p66
      %p68 = scmp.ne.s32.totalorder %s60, %s62
      %p69 = scmp.eq.s32.totalorder %s31, 1
      %p70 = por %p68, %p69
      %p71 = scmp.ne.s32.totalorder %s62, %s63
      %p72 = scmp.eq.s32.totalorder %s31, 0
      %p73 = por %p71, %p72
      %p74 = scmp.ne.s32.totalorder %s62, %s63
      %p75 = scmp.eq.s32.totalorder %s32, 1
      %p76 = por %p74, %p75
      %p78 = scmp.ne.s32.totalorder %s63, %s77
      %p79 = scmp.eq.s32.totalorder %s32, 0
      %p80 = por %p78, %p79
      %s82 = sadd.s32 %s81, 1
      %p85 = scmp.eq.s32.totalorder %s26, 1
      %p86 = scmp.ne.s32.totalorder %s81, %s83
      %p87 = scmp.eq.s32.totalorder %s26, 0
      %p88 = por %p86, %p87
      %p89 = scmp.ne.s32.totalorder %s81, %s83
      %p90 = scmp.eq.s32.totalorder %s31, 1
      %p91 = por %p89, %p90
      %p92 = scmp.ne.s32.totalorder %s83, %s84
      %p93 = scmp.eq.s32.totalorder %s31, 0
      %p94 = por %p92, %p93
      %p95 = scmp.ne.s32.totalorder %s83, %s84
      %p96 = scmp.eq.s32.totalorder %s32, 1
      %p97 = por %p95, %p96
      %p99 = scmp.ne.s32.totalorder %s84, %s98
      %p100 = scmp.eq.s32.totalorder %s32, 0
      %p101 = por %p99, %p100
      %s103 = sadd.s32 %s102, 1
      %p106 = scmp.eq.s32.totalorder %s26, 1
      %p107 = scmp.ne.s32.totalorder %s102, %s104
      %p108 = scmp.eq.s32.totalorder %s26, 0
      %p109 = por %p107, %p108
      %p110 = scmp.ne.s32.totalorder %s102, %s104
      %p111 = scmp.eq.s32.totalorder %s31, 1
      %p112 = por %p110, %p111
      %p113 = scmp.ne.s32.totalorder %s104, %s105
      %p114 = scmp.eq.s32.totalorder %s31, 0
      %p115 = por %p113, %p114
      %p116 = scmp.ne.s32.totalorder %s104, %s105
      %p117 = scmp.eq.s32.totalorder %s32, 1
      %p118 = por %p116, %p117
      %p120 = scmp.ne.s32.totalorder %s105, %s119
      %p121 = scmp.eq.s32.totalorder %s32, 0
      %p122 = por %p120, %p121
      %s124 = sadd.s32 %s123, 1
      %p127 = scmp.eq.s32.totalorder %s26, 1
      %p128 = scmp.ne.s32.totalorder %s123, %s125
      %p129 = scmp.eq.s32.totalorder %s26, 0
      %p130 = por %p128, %p129
      %p131 = scmp.ne.s32.totalorder %s123, %s125
      %p132 = scmp.eq.s32.totalorder %s31, 1
      %p133 = por %p131, %p132
      %p134 = scmp.ne.s32.totalorder %s125, %s126
      %p135 = scmp.eq.s32.totalorder %s31, 0
      %p136 = por %p134, %p135
      %p137 = scmp.ne.s32.totalorder %s125, %s126
      %p138 = scmp.eq.s32.totalorder %s32, 1
      %p139 = por %p137, %p138
      %p141 = scmp.ne.s32.totalorder %s126, %s140
      %p142 = scmp.eq.s32.totalorder %s32, 0
      %p143 = por %p141, %p142
      %s145 = sadd.s32 %s144, 1
      %p148 = scmp.eq.s32.totalorder %s26, 1
      %p149 = scmp.ne.s32.totalorder %s144, %s146
      %p150 = scmp.eq.s32.totalorder %s26, 0
      %p151 = por %p149, %p150
      %p152 = scmp.ne.s32.totalorder %s144, %s146
      %p153 = scmp.eq.s32.totalorder %s31, 1
      %p154 = por %p152, %p153
      %p155 = scmp.ne.s32.totalorder %s146, %s147
      %p156 = scmp.eq.s32.totalorder %s31, 0
      %p157 = por %p155, %p156
      %p158 = scmp.ne.s32.totalorder %s146, %s147
      %p159 = scmp.eq.s32.totalorder %s32, 1
      %p160 = por %p158, %p159
      %p162 = scmp.ne.s32.totalorder %s147, %s161
      %p163 = scmp.eq.s32.totalorder %s32, 0
      %p164 = por %p162, %p163
      %s166 = sadd.s32 %s165, 1
      %p169 = scmp.eq.s32.totalorder %s26, 1
      %p170 = scmp.ne.s32.totalorder %s165, %s167
      %p171 = scmp.eq.s32.totalorder %s26, 0
      %p172 = por %p170, %p171
      %p173 = scmp.ne.s32.totalorder %s165, %s167
      %p174 = scmp.eq.s32.totalorder %s31, 1
      %p175 = por %p173, %p174
      %p176 = scmp.ne.s32.totalorder %s167, %s168
      %p177 = scmp.eq.s32.totalorder %s31, 0
      %p178 = por %p176, %p177
      %p179 = scmp.ne.s32.totalorder %s167, %s168
      %p180 = scmp.eq.s32.totalorder %s32, 1
      %p181 = por %p179, %p180
      %p183 = scmp.ne.s32.totalorder %s168, %s182
      %p184 = scmp.eq.s32.totalorder %s32, 0
      %p185 = por %p183, %p184
      %s187 = sadd.s32 %s186, 1
      %p190 = scmp.eq.s32.totalorder %s26, 1
      %p191 = scmp.ne.s32.totalorder %s186, %s188
      %p192 = scmp.eq.s32.totalorder %s26, 0
      %p193 = por %p191, %p192
      %p194 = scmp.ne.s32.totalorder %s186, %s188
      %p195 = scmp.eq.s32.totalorder %s31, 1
      %p196 = por %p194, %p195
      %p197 = scmp.ne.s32.totalorder %s188, %s189
      %p198 = scmp.eq.s32.totalorder %s31, 0
      %p199 = por %p197, %p198
      %p200 = scmp.ne.s32.totalorder %s188, %s189
      %p201 = scmp.eq.s32.totalorder %s32, 1
      %p202 = por %p200, %p201
      %p204 = scmp.ne.s32.totalorder %s189, %s203
      %p205 = scmp.eq.s32.totalorder %s32, 0
      %p206 = por %p204, %p205
      %s208 = sadd.s32 %s207, 1
      %p211 = scmp.eq.s32.totalorder %s26, 1
      %p212 = scmp.ne.s32.totalorder %s207, %s209
      %p213 = scmp.eq.s32.totalorder %s26, 0
      %p214 = por %p212, %p213
      %p215 = scmp.ne.s32.totalorder %s207, %s209
      %p216 = scmp.eq.s32.totalorder %s31, 1
      %p217 = por %p215, %p216
      %p218 = scmp.ne.s32.totalorder %s209, %s210
      %p219 = scmp.eq.s32.totalorder %s31, 0
      %p220 = por %p218, %p219
      %p221 = scmp.ne.s32.totalorder %s209, %s210
      %p222 = scmp.eq.s32.totalorder %s32, 1
      %p223 = por %p221, %p222
      %p225 = scmp.ne.s32.totalorder %s210, %s224
      %p226 = scmp.eq.s32.totalorder %s32, 0
      %p227 = por %p225, %p226
      %s229 = sadd.s32 %s228, 1
      %p232 = scmp.eq.s32.totalorder %s26, 1
      %p233 = scmp.ne.s32.totalorder %s228, %s230
      %p234 = scmp.eq.s32.totalorder %s26, 0
      %p235 = por %p233, %p234
      %p236 = scmp.ne.s32.totalorder %s228, %s230
      %p237 = scmp.eq.s32.totalorder %s31, 1
      %p238 = por %p236, %p237
      %p239 = scmp.ne.s32.totalorder %s230, %s231
      %p240 = scmp.eq.s32.totalorder %s31, 0
      %p241 = por %p239, %p240
      %p242 = scmp.ne.s32.totalorder %s230, %s231
      %p243 = scmp.eq.s32.totalorder %s32, 1
      %p244 = por %p242, %p243
      %p246 = scmp.ne.s32.totalorder %s231, %s245
      %p247 = scmp.eq.s32.totalorder %s32, 0
      %p248 = por %p246, %p247
      %s250 = sadd.s32 %s249, 1
      %p253 = scmp.eq.s32.totalorder %s26, 1
      %p254 = scmp.ne.s32.totalorder %s249, %s251
      %p255 = scmp.eq.s32.totalorder %s26, 0
      %p256 = por %p254, %p255
      %p257 = scmp.ne.s32.totalorder %s249, %s251
      %p258 = scmp.eq.s32.totalorder %s31, 1
      %p259 = por %p257, %p258
      %p260 = scmp.ne.s32.totalorder %s251, %s252
      %p261 = scmp.eq.s32.totalorder %s31, 0
      %p262 = por %p260, %p261
      %p263 = scmp.ne.s32.totalorder %s251, %s252
      %p264 = scmp.eq.s32.totalorder %s32, 1
      %p265 = por %p263, %p264
      %p267 = scmp.ne.s32.totalorder %s252, %s266
      %p268 = scmp.eq.s32.totalorder %s32, 0
      %p269 = por %p267, %p268
      %s271 = sadd.s32 %s270, 1
      %p274 = scmp.eq.s32.totalorder %s26, 1
      %p275 = scmp.ne.s32.totalorder %s270, %s272
      %p276 = scmp.eq.s32.totalorder %s26, 0
      %p277 = por %p275, %p276
      %p278 = scmp.ne.s32.totalorder %s270, %s272
      %p279 = scmp.eq.s32.totalorder %s31, 1
      %p280 = por %p278, %p279
      %p281 = scmp.ne.s32.totalorder %s272, %s273
      %p282 = scmp.eq.s32.totalorder %s31, 0
      %p283 = por %p281, %p282
      %p284 = scmp.ne.s32.totalorder %s272, %s273
      %p285 = scmp.eq.s32.totalorder %s32, 1
      %p286 = por %p284, %p285
      %p288 = scmp.ne.s32.totalorder %s273, %s287
      %p289 = scmp.eq.s32.totalorder %s32, 0
      %p290 = por %p288, %p289
      %s292 = sadd.s32 %s291, 1
      %p295 = scmp.eq.s32.totalorder %s26, 1
      %p296 = scmp.ne.s32.totalorder %s291, %s293
      %p297 = scmp.eq.s32.totalorder %s26, 0
      %p298 = por %p296, %p297
      %p299 = scmp.ne.s32.totalorder %s291, %s293
      %p300 = scmp.eq.s32.totalorder %s31, 1
      %p301 = por %p299, %p300
      %p302 = scmp.ne.s32.totalorder %s293, %s294
      %p303 = scmp.eq.s32.totalorder %s31, 0
      %p304 = por %p302, %p303
      %p305 = scmp.ne.s32.totalorder %s293, %s294
      %p306 = scmp.eq.s32.totalorder %s32, 1
      %p307 = por %p305, %p306
      %p309 = scmp.ne.s32.totalorder %s294, %s308
      %p310 = scmp.eq.s32.totalorder %s32, 0
      %p311 = por %p309, %p310
      %s313 = sadd.s32 %s312, 1
      %p316 = scmp.eq.s32.totalorder %s26, 1
      %p317 = scmp.ne.s32.totalorder %s312, %s314
      %p318 = scmp.eq.s32.totalorder %s26, 0
      %p319 = por %p317, %p318
      %p320 = scmp.ne.s32.totalorder %s312, %s314
      %p321 = scmp.eq.s32.totalorder %s31, 1
      %p322 = por %p320, %p321
      %p323 = scmp.ne.s32.totalorder %s314, %s315
      %p324 = scmp.eq.s32.totalorder %s31, 0
      %p325 = por %p323, %p324
      %p326 = scmp.ne.s32.totalorder %s314, %s315
      %p327 = scmp.eq.s32.totalorder %s32, 1
      %p328 = por %p326, %p327
      %p330 = scmp.ne.s32.totalorder %s315, %s329
      %p331 = scmp.eq.s32.totalorder %s32, 0
      %p332 = por %p330, %p331
      %s334 = sadd.s32 %s333, 1
      %p337 = scmp.eq.s32.totalorder %s26, 1
      %p338 = scmp.ne.s32.totalorder %s333, %s335
      %p339 = scmp.eq.s32.totalorder %s26, 0
      %p340 = por %p338, %p339
      %p341 = scmp.ne.s32.totalorder %s333, %s335
      %p342 = scmp.eq.s32.totalorder %s31, 1
      %p343 = por %p341, %p342
      %p344 = scmp.ne.s32.totalorder %s335, %s336
      %p345 = scmp.eq.s32.totalorder %s31, 0
      %p346 = por %p344, %p345
      %p347 = scmp.ne.s32.totalorder %s335, %s336
      %p348 = scmp.eq.s32.totalorder %s32, 1
      %p349 = por %p347, %p348
      %p351 = scmp.ne.s32.totalorder %s336, %s350
      %p352 = scmp.eq.s32.totalorder %s32, 0
      %p353 = por %p351, %p352
      %s355 = sadd.s32 %s354, 1
      %p358 = scmp.eq.s32.totalorder %s26, 1
      %p359 = scmp.ne.s32.totalorder %s354, %s356
      %p360 = scmp.eq.s32.totalorder %s26, 0
      %p361 = por %p359, %p360
      %p362 = scmp.ne.s32.totalorder %s354, %s356
      %p363 = scmp.eq.s32.totalorder %s31, 1
      %p364 = por %p362, %p363
      %p365 = scmp.ne.s32.totalorder %s356, %s357
      %p366 = scmp.eq.s32.totalorder %s31, 0
      %p367 = por %p365, %p366
      %p368 = scmp.ne.s32.totalorder %s356, %s357
      %p369 = scmp.eq.s32.totalorder %s32, 1
      %p370 = por %p368, %p369
      %p372 = scmp.ne.s32.totalorder %s357, %s371
      %p373 = scmp.eq.s32.totalorder %s32, 0
      %p374 = por %p372, %p373
      %s376 = sadd.s32 %s375, 1
      %p379 = scmp.eq.s32.totalorder %s26, 1
      %p380 = scmp.ne.s32.totalorder %s375, %s377
      %p381 = scmp.eq.s32.totalorder %s26, 0
      %p382 = por %p380, %p381
      %p383 = scmp.ne.s32.totalorder %s375, %s377
      %p384 = scmp.eq.s32.totalorder %s31, 1
      %p385 = por %p383, %p384
      %p386 = scmp.ne.s32.totalorder %s377, %s378
      %p387 = scmp.eq.s32.totalorder %s31, 0
      %p388 = por %p386, %p387
      %p389 = scmp.ne.s32.totalorder %s377, %s378
      %p390 = scmp.eq.s32.totalorder %s32, 1
      %p391 = por %p389, %p390
      %p393 = scmp.ne.s32.totalorder %s378, %s392
      %p394 = scmp.eq.s32.totalorder %s32, 0
      %p395 = por %p393, %p394
      %s396 = ssub.s32 %s26, %s33
      %p397 = scmp.eq.s32.totalorder %s396, 0
      %s399 = sadd.s32 %s398, 1
      %s400 = scalar_select %p397, %s398, %s399
      %p403 = pneg %p397
      %p404 = scmp.eq.s32.totalorder %s26, 1
      %p405 = por %p403, %p404
      %p406 = scmp.ne.s32.totalorder %s398, %s401
      %p407 = scmp.eq.s32.totalorder %s26, 0
      %p408 = por %p406, %p407
      %p409 = scmp.ne.s32.totalorder %s398, %s401
      %p410 = scmp.eq.s32.totalorder %s31, 1
      %p411 = por %p409, %p410
      %p412 = scmp.ne.s32.totalorder %s401, %s402
      %p413 = scmp.eq.s32.totalorder %s31, 0
      %p414 = por %p412, %p413
      %p415 = scmp.ne.s32.totalorder %s401, %s402
      %p416 = scmp.eq.s32.totalorder %s32, 1
      %p417 = por %p415, %p416
      %p419 = scmp.ne.s32.totalorder %s402, %s418
      %p420 = scmp.eq.s32.totalorder %s32, 0
      %p421 = por %p419, %p420
      %p422 = scmp.le.s32.totalorder 1, %s26
      %p423 = scmp.lt.s32.totalorder %s26, 3
      %p424 = pnand %p422, %p423
      %p425 = pneg %p424
      // Predicated region
      $region9: #{tpu_custom_call.1} parent=5 // pred_check
        _
      $region10: #{tpu_custom_call.1} parent=5 // pred_check_branch
        %427 = sbr.rel (%p424) target = $region12
      $region11: #{tpu_custom_call.1} parent=5 // pred_region
        %s428 = ssub.s32 %s26, 1
        // Predicated region
        $region13: #{tpu_custom_call.1} parent=11 // pred_check
          %p429 = pneg %p73
        $region14: #{tpu_custom_call.1} parent=11 // pred_check_branch
          %431 = sbr.rel (%p429) target = $region16
        $region15: #{tpu_custom_call.1} parent=11 // pred_region
          _
        $region16: #{tpu_custom_call.1} parent=11 // pred_fallthru
          _
        // Predicated region
        $region17: #{tpu_custom_call.1} parent=11 // pred_check
          %p432 = pneg %p94
        $region18: #{tpu_custom_call.1} parent=11 // pred_check_branch
          %434 = sbr.rel (%p432) target = $region20
        $region19: #{tpu_custom_call.1} parent=11 // pred_region
          _
        $region20: #{tpu_custom_call.1} parent=11 // pred_fallthru
          _
        // Predicated region
        $region21: #{tpu_custom_call.1} parent=11 // pred_check
          %p435 = pneg %p115
        $region22: #{tpu_custom_call.1} parent=11 // pred_check_branch
          %437 = sbr.rel (%p435) target = $region24
        $region23: #{tpu_custom_call.1} parent=11 // pred_region
          _
        $region24: #{tpu_custom_call.1} parent=11 // pred_fallthru
          _
        // Predicated region
        $region25: #{tpu_custom_call.1} parent=11 // pred_check
          %p438 = pneg %p136
        $region26: #{tpu_custom_call.1} parent=11 // pred_check_branch
          %440 = sbr.rel (%p438) target = $region28
        $region27: #{tpu_custom_call.1} parent=11 // pred_region
          _
        $region28: #{tpu_custom_call.1} parent=11 // pred_fallthru
          _
        // Predicated region
        $region29: #{tpu_custom_call.1} parent=11 // pred_check
          %p441 = pneg %p157
        $region30: #{tpu_custom_call.1} parent=11 // pred_check_branch
          %443 = sbr.rel (%p441) target = $region32
        $region31: #{tpu_custom_call.1} parent=11 // pred_region
          _
        $region32: #{tpu_custom_call.1} parent=11 // pred_fallthru
          _
        // Predicated region
        $region33: #{tpu_custom_call.1} parent=11 // pred_check
          %p444 = pneg %p178
        $region34: #{tpu_custom_call.1} parent=11 // pred_check_branch
          %446 = sbr.rel (%p444) target = $region36
        $region35: #{tpu_custom_call.1} parent=11 // pred_region
          _
        $region36: #{tpu_custom_call.1} parent=11 // pred_fallthru
          _
        // Predicated region
        $region37: #{tpu_custom_call.1} parent=11 // pred_check
          %p447 = pneg %p199
        $region38: #{tpu_custom_call.1} parent=11 // pred_check_branch
          %449 = sbr.rel (%p447) target = $region40
        $region39: #{tpu_custom_call.1} parent=11 // pred_region
          _
        $region40: #{tpu_custom_call.1} parent=11 // pred_fallthru
          _
        // Predicated region
        $region41: #{tpu_custom_call.1} parent=11 // pred_check
          %p450 = pneg %p220
        $region42: #{tpu_custom_call.1} parent=11 // pred_check_branch
          %452 = sbr.rel (%p450) target = $region44
        $region43: #{tpu_custom_call.1} parent=11 // pred_region
          _
        $region44: #{tpu_custom_call.1} parent=11 // pred_fallthru
          _
        // Predicated region
        $region45: #{tpu_custom_call.1} parent=11 // pred_check
          %p453 = pneg %p241
        $region46: #{tpu_custom_call.1} parent=11 // pred_check_branch
          %455 = sbr.rel (%p453) target = $region48
        $region47: #{tpu_custom_call.1} parent=11 // pred_region
          _
        $region48: #{tpu_custom_call.1} parent=11 // pred_fallthru
          _
        // Predicated region
        $region49: #{tpu_custom_call.1} parent=11 // pred_check
          %p456 = pneg %p262
        $region50: #{tpu_custom_call.1} parent=11 // pred_check_branch
          %458 = sbr.rel (%p456) target = $region52
        $region51: #{tpu_custom_call.1} parent=11 // pred_region
          _
        $region52: #{tpu_custom_call.1} parent=11 // pred_fallthru
          _
        // Predicated region
        $region53: #{tpu_custom_call.1} parent=11 // pred_check
          %p459 = pneg %p283
        $region54: #{tpu_custom_call.1} parent=11 // pred_check_branch
          %461 = sbr.rel (%p459) target = $region56
        $region55: #{tpu_custom_call.1} parent=11 // pred_region
          _
        $region56: #{tpu_custom_call.1} parent=11 // pred_fallthru
          _
        // Predicated region
        $region57: #{tpu_custom_call.1} parent=11 // pred_check
          %p462 = pneg %p304
        $region58: #{tpu_custom_call.1} parent=11 // pred_check_branch
          %464 = sbr.rel (%p462) target = $region60
        $region59: #{tpu_custom_call.1} parent=11 // pred_region
          _
        $region60: #{tpu_custom_call.1} parent=11 // pred_fallthru
          _
        // Predicated region
        $region61: #{tpu_custom_call.1} parent=11 // pred_check
          %p465 = pneg %p325
        $region62: #{tpu_custom_call.1} parent=11 // pred_check_branch
          %467 = sbr.rel (%p465) target = $region64
        $region63: #{tpu_custom_call.1} parent=11 // pred_region
          _
        $region64: #{tpu_custom_call.1} parent=11 // pred_fallthru
          _
        // Predicated region
        $region65: #{tpu_custom_call.1} parent=11 // pred_check
          %p468 = pneg %p346
        $region66: #{tpu_custom_call.1} parent=11 // pred_check_branch
          %470 = sbr.rel (%p468) target = $region68
        $region67: #{tpu_custom_call.1} parent=11 // pred_region
          _
        $region68: #{tpu_custom_call.1} parent=11 // pred_fallthru
          _
        // Predicated region
        $region69: #{tpu_custom_call.1} parent=11 // pred_check
          %p471 = pneg %p367
        $region70: #{tpu_custom_call.1} parent=11 // pred_check_branch
          %473 = sbr.rel (%p471) target = $region72
        $region71: #{tpu_custom_call.1} parent=11 // pred_region
          _
        $region72: #{tpu_custom_call.1} parent=11 // pred_fallthru
          _
        // Predicated region
        $region73: #{tpu_custom_call.1} parent=11 // pred_check
          %p474 = pneg %p388
        $region74: #{tpu_custom_call.1} parent=11 // pred_check_branch
          %476 = sbr.rel (%p474) target = $region76
        $region75: #{tpu_custom_call.1} parent=11 // pred_region
          _
        $region76: #{tpu_custom_call.1} parent=11 // pred_fallthru
          _
      $region12: #{tpu_custom_call.1} parent=5 // pred_fallthru
        _
      %p477 = scmp.lt.s32.totalorder %s26, 2
      // Predicated region
      $region77: #{tpu_custom_call.1} parent=5 // pred_check
        %p478 = pneg %p477
      $region78: #{tpu_custom_call.1} parent=5 // pred_check_branch
        %480 = sbr.rel (%p478) target = $region80
      $region79: #{tpu_custom_call.1} parent=5 // pred_region
        // Predicated region
        $region81: #{tpu_custom_call.1} parent=79 // pred_check
          %p481 = pneg %p46
        $region82: #{tpu_custom_call.1} parent=79 // pred_check_branch
          %483 = sbr.rel (%p481) target = $region84
        $region83: #{tpu_custom_call.1} parent=79 // pred_region
          %p484 = scmp.lt.s32.totalorder %s26, 1
          %s485 = scalar_select %p484, %s26, 1
          %s486 = smul.addr %s485, 2
          %s487 = smul.addr %s486, 8
          %s488 = scalar_lea.vmem %s0, %s487
        $region84: #{tpu_custom_call.1} parent=79 // pred_fallthru
          _
      $region80: #{tpu_custom_call.1} parent=5 // pred_fallthru
        _
      %p489 = scmp.le.s32.totalorder 1, %s26
      %p490 = scmp.lt.s32.totalorder %s26, 3
      %p491 = pnand %p489, %p490
      %p492 = pneg %p491
      // Predicated region
      $region85: #{tpu_custom_call.1} parent=5 // pred_check
        _
      $region86: #{tpu_custom_call.1} parent=5 // pred_check_branch
        %494 = sbr.rel (%p491) target = $region88
      $region87: #{tpu_custom_call.1} parent=5 // pred_region
        %s495 = ssub.s32 %s26, 1
        %p496 = scmp.lt.s32.totalorder %s31, 1
        %s497 = scalar_select %p496, %s31, 1
        %s498 = smul.addr %s497, 2
        %s499 = smul.addr %s498, 8
        %s500 = scalar_lea.vmem %s0, %s499
        %p501 = pneg %p52
        %p502 = pneg %p49
        %p503 = pneg %p73
        %p504 = pneg %p70
        %p505 = pneg %p94
        %p506 = pneg %p91
        %p507 = pneg %p115
        %p508 = pneg %p112
        %p509 = pneg %p136
        %p510 = pneg %p133
        %p511 = pneg %p157
        %p512 = pneg %p154
        %p513 = pneg %p178
        %p514 = pneg %p175
        %p515 = pneg %p199
        %p516 = pneg %p196
        %p517 = pneg %p220
        %p518 = pneg %p217
        %p519 = pneg %p241
        %p520 = pneg %p238
        %p521 = pneg %p262
        %p522 = pneg %p259
        %p523 = pneg %p283
        %p524 = pneg %p280
        %p525 = pneg %p304
        %p526 = pneg %p301
        %p527 = pneg %p325
        %p528 = pneg %p322
        %p529 = pneg %p346
        %p530 = pneg %p343
        %p531 = pneg %p367
        %p532 = pneg %p364
        %p533 = pneg %p388
        %p534 = pneg %p385
        %p535 = pneg %p414
        %p536 = pneg %p411
        %s537 = sand.u32 %s401, 1
        %s538 = scalar_lea.sflag [#allocation3], %s537
        %s539 = sand.u32 %s401, 1
        %s540 = smul.addr %s539, 16
        %s541 = scalar_lea.vmem [#allocation2], %s540
        %p542 = scmp.lt.s32.totalorder %s31, 1
        %s543 = scalar_select %p542, %s31, 1
        %s544 = smul.addr %s543, 2
        %s545 = smul.addr %s544, 8
        %s546 = scalar_lea.vmem %s0, %s545
        %v547 = vld [vmem:[%s546] sm:$0xff]
        %v548 = vld [vmem:[%s546 + $0x8] sm:$0xff]
        %v549 = vld [vmem:[%s1] sm:$0xff]
        %v550 = vld [vmem:[%s1 + $0x8] sm:$0xff]
        %v551 = vld [vmem:[%s1 + $0x10] sm:$0xff]
        %v552 = vld [vmem:[%s1 + $0x18] sm:$0xff]
        %v553 = vld [vmem:[%s1 + $0x20] sm:$0xff]
        %v554 = vld [vmem:[%s1 + $0x28] sm:$0xff]
        %v555 = vld [vmem:[%s2] sm:$0xff]
        %v556 = vld [vmem:[%s2 + $0x8] sm:$0xff]
        %vm557 = vcmask 392192
        %v559 = vsel %vm557, %v547, 0
        %v562 = vsel %vm557, %v548, 0
        %564 = vmatprep.subr.mxu0 0.0
        %565 = vmatpush1.msra.mxu0 %v549
        %566 = vmatprep.subr.mxu0 0.0
        %567 = vmatpush1.msra.mxu0 %v550
        %568 = vmatprep.subr.mxu0 0.0
        %569 = vmatpush1.msra.mxu0 %v551
        %570 = vmatprep.subr.mxu0 0.0
        %571 = vmatpush1.msra.mxu0 %v552
        %572 = vmatprep.subr.mxu0 0.0
        %573 = vmatpush1.msra.mxu0 %v553
        %574 = vmatprep.subr.mxu0 0.0
        %575 = vmatpush1.msra.mxu0 %v554
        %576 = vmatprep.subr.mxu0 0.0
        %577 = vmatpush1.msra.mxu0 0.0
        %578 = vmatprep.subr.mxu0 0.0
        %579 = vmatpush1.msra.mxu0 0.0
        %580 = vmatprep.subr.mxu0 0.0
        %581 = vmatpush1.msra.mxu0 0.0
        %582 = vmatprep.subr.mxu0 0.0
        %583 = vmatpush1.msra.mxu0 0.0
        %584 = vmatprep.subr.mxu0 0.0
        %585 = vmatpush1.msra.mxu0 0.0
        %586 = vmatprep.subr.mxu0 0.0
        %587 = vmatpush1.msra.mxu0 0.0
        %588 = vmatprep.subr.mxu0 0.0
        %589 = vmatpush1.msra.mxu0 0.0
        %590 = vmatprep.subr.mxu0 0.0
        %591 = vmatpush1.msra.mxu0 0.0
        %592 = vmatprep.subr.mxu0 0.0
        %593 = vmatpush1.msra.mxu0 0.0
        %594 = vmatprep.subr.mxu0 0.0
        %595 = vmatpush1.msra.mxu0 0.0
        %596 = vmatprep.subr.mxu0 0.0
        %597 = vmatpush1.msra.mxu0 0.0
        %598 = vmatprep.subr.mxu0 0.0
        %599 = vmatpush1.msra.mxu0 0.0
        %600 = vmatprep.subr.mxu0 0.0
        %601 = vmatpush1.msra.mxu0 0.0
        %602 = vmatprep.subr.mxu0 0.0
        %603 = vmatpush1.msra.mxu0 0.0
        %604 = vmatprep.subr.mxu0 0.0
        %605 = vmatpush1.msra.mxu0 0.0
        %606 = vmatprep.subr.mxu0 0.0
        %607 = vmatpush1.msra.mxu0 0.0
        %608 = vmatprep.subr.mxu0 0.0
        %609 = vmatpush1.msra.mxu0 0.0
        %610 = vmatprep.subr.mxu0 0.0
        %611 = vmatpush1.msra.mxu0 0.0
        %612 = vmatprep.subr.mxu0 0.0
        %613 = vmatpush1.msra.mxu0 0.0
        %614 = vmatprep.subr.mxu0 0.0
        %615 = vmatpush1.msra.mxu0 0.0
        %616 = vmatprep.subr.mxu0 0.0
        %617 = vmatpush1.msra.mxu0 0.0
        %618 = vmatprep.subr.mxu0 0.0
        %619 = vmatpush1.msra.mxu0 0.0
        %620 = vmatprep.subr.mxu0 0.0
        %621 = vmatpush1.msra.mxu0 0.0
        %622 = vmatprep.subr.mxu0 0.0
        %623 = vmatpush1.msra.mxu0 0.0
        %624 = vmatprep.subr.mxu0 0.0
        %625 = vmatpush1.msra.mxu0 0.0
        %626 = vmatprep.subr.mxu0 0.0
        %627 = vmatpush1.msra.mxu0 0.0
        %628 = vmatprep.mubr.f32.mxu0 0.0
        %629 = vmatmul.mubr.f32.gmra.mrb[0].mxu0 %v559
        %v630 = vpop.f32.mrb[0].mxu0
        %v631 = vadd.f32 %v555, %v630
        %v632 = vpop.f32.mrb[0].mxu0
        %633 = vmatprep.mubr.f32.mxu0 0.0
        %634 = vmatmul.mubr.f32.gmra.mrb[0].mxu0 %v562
        %v635 = vpop.f32.mrb[0].mxu0
        %v636 = vadd.f32 %v556, %v635
        %v637 = vpop.f32.mrb[0].mxu0
        %638 = vdwg.mxu0
        %v639 = vld [vmem:[%s3] sm:$0x1]
        %v640 = vld [vmem:[%s4] sm:$0x1]
        %vm641 = vcmask 261120
        %v642 = vsel %vm641, %v631, 0.0
        %643 = vadd.xlane.f32.xlu0 %v642
        %v644 = vpop.xlane.xlu0 %643
        %v645 = vsel %vm641, %v636, 0.0
        %646 = vadd.xlane.f32.xlu0 %v645
        %v647 = vpop.xlane.xlu0 %646
        %v648 = vrcp.pop 32.0
        %v649 = vmul.f32 %v644, %v648
        %v650 = vmul.f32 %v647, %v648
        %v651 = vsub.f32 %v631, %v649
        %v652 = vsub.f32 %v636, %v650
        %v653 = vmul.f32 %v651, %v651
        %v654 = vmul.f32 %v652, %v652
        %v655 = vsel %vm641, %v653, 0.0
        %656 = vadd.xlane.f32.xlu0 %v655
        %v657 = vpop.xlane.xlu0 %656
        %v658 = vsel %vm641, %v654, 0.0
        %659 = vadd.xlane.f32.xlu0 %v658
        %v660 = vpop.xlane.xlu0 %659
        %v661 = vmul.f32 %v657, %v648
        %v662 = vmul.f32 %v660, %v648
        %v663 = vadd.f32 %v661, 1e-06
        %v664 = vadd.f32 %v662, 1e-06
        %v665 = vrsqrt.pop %v663
        %v666 = vrsqrt.pop %v664
        %v667 = vmul.f32 %v651, %v665
        %v668 = vmul.f32 %v652, %v666
        %v670 = vlaneseq
        %v671 = vshrl.u32 %v670, 7
        %v672 = vsub.s32 0, %v671
        %v673 = vrot.slane %v639, %v672
        %v675 = vmul.f32 %v667, %v673
        %v676 = vmul.f32 %v668, %v673
        %v678 = vlaneseq
        %v679 = vshrl.u32 %v678, 7
        %v680 = vsub.s32 0, %v679
        %v681 = vrot.slane %v640, %v680
        %v683 = vadd.f32 %v675, %v681
        %v684 = vadd.f32 %v676, %v681
        %v685 = vld [vmem:[%s5] sm:$0xff]
        %v686 = vld [vmem:[%s5 + $0x8] sm:$0xff]
        %v687 = vld [vmem:[%s5 + $0x10] sm:$0xff]
        %v688 = vld [vmem:[%s5 + $0x18] sm:$0xff]
        %v689 = vld [vmem:[%s6] sm:$0x1]
        %v691 = vlaneseq
        %v692 = vshrl.u32 %v691, 7
        %v693 = vsub.s32 0, %v692
        %v694 = vrot.slane %v689, %v693
        %v697 = vsel %vm641, %v683, 0
        %v700 = vsel %vm641, %v684, 0
        %702 = vmatprep.subr.mxu0 0.0
        %703 = vmatpush1.msra.mxu0 %v685
        %704 = vmatprep.subr.mxu0 0.0
        %705 = vmatpush1.msra.mxu0 %v686
        %706 = vmatprep.subr.mxu0 0.0
        %707 = vmatpush1.msra.mxu0 %v687
        %708 = vmatprep.subr.mxu0 0.0
        %709 = vmatpush1.msra.mxu0 %v688
        %710 = vmatprep.subr.mxu0 0.0
        %711 = vmatpush1.msra.mxu0 0.0
        %712 = vmatprep.subr.mxu0 0.0
        %713 = vmatpush1.msra.mxu0 0.0
        %714 = vmatprep.subr.mxu0 0.0
        %715 = vmatpush1.msra.mxu0 0.0
        %716 = vmatprep.subr.mxu0 0.0
        %717 = vmatpush1.msra.mxu0 0.0
        %718 = vmatprep.subr.mxu0 0.0
        %719 = vmatpush1.msra.mxu0 0.0
        %720 = vmatprep.subr.mxu0 0.0
        %721 = vmatpush1.msra.mxu0 0.0
        %722 = vmatprep.subr.mxu0 0.0
        %723 = vmatpush1.msra.mxu0 0.0
        %724 = vmatprep.subr.mxu0 0.0
        %725 = vmatpush1.msra.mxu0 0.0
        %726 = vmatprep.subr.mxu0 0.0
        %727 = vmatpush1.msra.mxu0 0.0
        %728 = vmatprep.subr.mxu0 0.0
        %729 = vmatpush1.msra.mxu0 0.0
        %730 = vmatprep.subr.mxu0 0.0
        %731 = vmatpush1.msra.mxu0 0.0
        %732 = vmatprep.subr.mxu0 0.0
        %733 = vmatpush1.msra.mxu0 0.0
        %734 = vmatprep.subr.mxu0 0.0
        %735 = vmatpush1.msra.mxu0 0.0
        %736 = vmatprep.subr.mxu0 0.0
        %737 = vmatpush1.msra.mxu0 0.0
        %738 = vmatprep.subr.mxu0 0.0
        %739 = vmatpush1.msra.mxu0 0.0
        %740 = vmatprep.subr.mxu0 0.0
        %741 = vmatpush1.msra.mxu0 0.0
        %742 = vmatprep.subr.mxu0 0.0
        %743 = vmatpush1.msra.mxu0 0.0
        %744 = vmatprep.subr.mxu0 0.0
        %745 = vmatpush1.msra.mxu0 0.0
        %746 = vmatprep.subr.mxu0 0.0
        %747 = vmatpush1.msra.mxu0 0.0
        %748 = vmatprep.subr.mxu0 0.0
        %749 = vmatpush1.msra.mxu0 0.0
        %750 = vmatprep.subr.mxu0 0.0
        %751 = vmatpush1.msra.mxu0 0.0
        %752 = vmatprep.subr.mxu0 0.0
        %753 = vmatpush1.msra.mxu0 0.0
        %754 = vmatprep.subr.mxu0 0.0
        %755 = vmatpush1.msra.mxu0 0.0
        %756 = vmatprep.subr.mxu0 0.0
        %757 = vmatpush1.msra.mxu0 0.0
        %758 = vmatprep.subr.mxu0 0.0
        %759 = vmatpush1.msra.mxu0 0.0
        %760 = vmatprep.subr.mxu0 0.0
        %761 = vmatpush1.msra.mxu0 0.0
        %762 = vmatprep.subr.mxu0 0.0
        %763 = vmatpush1.msra.mxu0 0.0
        %764 = vmatprep.subr.mxu0 0.0
        %765 = vmatpush1.msra.mxu0 0.0
        %766 = vmatprep.mubr.f32.mxu0 0.0
        %767 = vmatmul.mubr.f32.gmra.mrb[0].mxu0 %v697
        %v768 = vpop.f32.mrb[0].mxu0
        %v769 = vadd.f32 %v694, %v768
        %v770 = vpop.f32.mrb[0].mxu0
        %771 = vmatprep.mubr.f32.mxu0 0.0
        %772 = vmatmul.mubr.f32.gmra.mrb[0].mxu0 %v700
        %v773 = vpop.f32.mrb[0].mxu0
        %v774 = vadd.f32 %v694, %v773
        %v775 = vpop.f32.mrb[0].mxu0
        %776 = vdwg.mxu0
        %779 = vrot.lane.b32.xlu0 %v769, 96
        %v780 = vpop.permute.xlu0 %779
        %781 = vrot.lane.b32.xlu0 %v774, 96
        %v782 = vpop.permute.xlu0 %781
        %vm783 = vcmask 64512
        %v784 = vsel %vm783, %v769, 0
        %v786 = vsel %vm783, %v774, 0
        %v788 = vsel %vm783, %v780, 0
        %v790 = vsel %vm783, %v782, 0
        %792 = vmatprep.subr.mxu0 0.0
        %793 = vmatpush1.xpose.msra.mxu0 %v788
        %794 = vmatprep.subr.mxu0 0.0
        %795 = vmatpush1.xpose.msra.mxu0 %v790
        %796 = vmatprep.subr.mxu0 0.0
        %797 = vmatpush1.xpose.msra.mxu0 0.0
        %798 = vmatprep.subr.mxu0 0.0
        %799 = vmatpush1.xpose.msra.mxu0 0.0
        %800 = vmatprep.subr.mxu0 0.0
        %801 = vmatpush1.xpose.msra.mxu0 0.0
        %802 = vmatprep.subr.mxu0 0.0
        %803 = vmatpush1.xpose.msra.mxu0 0.0
        %804 = vmatprep.subr.mxu0 0.0
        %805 = vmatpush1.xpose.msra.mxu0 0.0
        %806 = vmatprep.subr.mxu0 0.0
        %807 = vmatpush1.xpose.msra.mxu0 0.0
        %808 = vmatprep.subr.mxu0 0.0
        %809 = vmatpush1.xpose.msra.mxu0 0.0
        %810 = vmatprep.subr.mxu0 0.0
        %811 = vmatpush1.xpose.msra.mxu0 0.0
        %812 = vmatprep.subr.mxu0 0.0
        %813 = vmatpush1.xpose.msra.mxu0 0.0
        %814 = vmatprep.subr.mxu0 0.0
        %815 = vmatpush1.xpose.msra.mxu0 0.0
        %816 = vmatprep.subr.mxu0 0.0
        %817 = vmatpush1.xpose.msra.mxu0 0.0
        %818 = vmatprep.subr.mxu0 0.0
        %819 = vmatpush1.xpose.msra.mxu0 0.0
        %820 = vmatprep.subr.mxu0 0.0
        %821 = vmatpush1.xpose.msra.mxu0 0.0
        %822 = vmatprep.subr.mxu0 0.0
        %823 = vmatpush1.xpose.msra.mxu0 0.0
        %824 = vmatprep.subr.mxu0 0.0
        %825 = vmatpush1.xpose.msra.mxu0 0.0
        %826 = vmatprep.subr.mxu0 0.0
        %827 = vmatpush1.xpose.msra.mxu0 0.0
        %828 = vmatprep.subr.mxu0 0.0
        %829 = vmatpush1.xpose.msra.mxu0 0.0
        %830 = vmatprep.subr.mxu0 0.0
        %831 = vmatpush1.xpose.msra.mxu0 0.0
        %832 = vmatprep.subr.mxu0 0.0
        %833 = vmatpush1.xpose.msra.mxu0 0.0
        %834 = vmatprep.subr.mxu0 0.0
        %835 = vmatpush1.xpose.msra.mxu0 0.0
        %836 = vmatprep.subr.mxu0 0.0
        %837 = vmatpush1.xpose.msra.mxu0 0.0
        %838 = vmatprep.subr.mxu0 0.0
        %839 = vmatpush1.xpose.msra.mxu0 0.0
        %840 = vmatprep.subr.mxu0 0.0
        %841 = vmatpush1.xpose.msra.mxu0 0.0
        %842 = vmatprep.subr.mxu0 0.0
        %843 = vmatpush1.xpose.msra.mxu0 0.0
        %844 = vmatprep.subr.mxu0 0.0
        %845 = vmatpush1.xpose.msra.mxu0 0.0
        %846 = vmatprep.subr.mxu0 0.0
        %847 = vmatpush1.xpose.msra.mxu0 0.0
        %848 = vmatprep.subr.mxu0 0.0
        %849 = vmatpush1.xpose.msra.mxu0 0.0
        %850 = vmatprep.subr.mxu0 0.0
        %851 = vmatpush1.xpose.msra.mxu0 0.0
        %852 = vmatprep.subr.mxu0 0.0
        %853 = vmatpush1.xpose.msra.mxu0 0.0
        %854 = vmatprep.subr.mxu0 0.0
        %855 = vmatpush1.xpose.msra.mxu0 0.0
        %856 = vmatprep.mubr.f32.mxu0 0.0
        %857 = vmatmul.mubr.f32.gmra.mrb[0].mxu0 %v784
        %v858 = vpop.f32.mrb[0].mxu0
        %v859 = vadd.f32 0.0, %v858
        %v860 = vpop.f32.mrb[0].mxu0
        %861 = vmatprep.mubr.f32.mxu0 0.0
        %862 = vmatmul.mubr.f32.gmra.mrb[0].mxu0 %v786
        %v863 = vpop.f32.mrb[0].mxu0
        %v864 = vadd.f32 0.0, %v863
        %v865 = vpop.f32.mrb[0].mxu0
        %866 = vdwg.mxu0
        %v867 = vmul.f32 %v859, 0.35355338
        %v868 = vmul.f32 %v864, 0.35355338
        %vm869 = vcmask 130048
        %v870 = vsel %vm869, %v867, -inf
        %871 = vmax.xlane.f32.xlu0 %v870
        %v872 = vpop.xlane.xlu0 %871
        %v873 = vsel %vm869, %v868, -inf
        %874 = vmax.xlane.f32.xlu0 %v873
        %v875 = vpop.xlane.xlu0 %874
        %v876 = vsub.f32 %v867, %v872
        %v877 = vsub.f32 %v868, %v875
        %v878 = vmul.f32 %v876, 1.442695
        %v879 = vpow.pop %v878
        %v880 = vmul.f32 %v877, 1.442695
        %v881 = vpow.pop %v880
        %v882 = vsel %vm869, %v879, 0.0
        %883 = vadd.xlane.f32.xlu0 %v882
        %v884 = vpop.xlane.xlu0 %883
        %v885 = vsel %vm869, %v881, 0.0
        %886 = vadd.xlane.f32.xlu0 %v885
        %v887 = vpop.xlane.xlu0 %886
        %v888 = vrcp.pop %v884
        %v889 = vrcp.pop %v887
        %v890 = vmul.f32 %v879, %v888
        %v891 = vmul.f32 %v881, %v889
        %892 = vrot.lane.b32.xlu0 %v769, 64
        %v893 = vpop.permute.xlu0 %892
        %894 = vrot.lane.b32.xlu0 %v774, 64
        %v895 = vpop.permute.xlu0 %894
        %v899 = vsel %vm869, %v890, 0
        %v902 = vsel %vm869, %v891, 0
        %904 = vmatprep.subr.mxu0 0.0
        %905 = vmatpush1.msra.mxu0 %v893
        %906 = vmatprep.subr.mxu0 0.0
        %907 = vmatpush1.msra.mxu0 %v895
        %908 = vmatprep.subr.mxu0 0.0
        %909 = vmatpush1.msra.mxu0 0.0
        %910 = vmatprep.subr.mxu0 0.0
        %911 = vmatpush1.msra.mxu0 0.0
        %912 = vmatprep.subr.mxu0 0.0
        %913 = vmatpush1.msra.mxu0 0.0
        %914 = vmatprep.subr.mxu0 0.0
        %915 = vmatpush1.msra.mxu0 0.0
        %916 = vmatprep.subr.mxu0 0.0
        %917 = vmatpush1.msra.mxu0 0.0
        %918 = vmatprep.subr.mxu0 0.0
        %919 = vmatpush1.msra.mxu0 0.0
        %920 = vmatprep.subr.mxu0 0.0
        %921 = vmatpush1.msra.mxu0 0.0
        %922 = vmatprep.subr.mxu0 0.0
        %923 = vmatpush1.msra.mxu0 0.0
        %924 = vmatprep.subr.mxu0 0.0
        %925 = vmatpush1.msra.mxu0 0.0
        %926 = vmatprep.subr.mxu0 0.0
        %927 = vmatpush1.msra.mxu0 0.0
        %928 = vmatprep.subr.mxu0 0.0
        %929 = vmatpush1.msra.mxu0 0.0
        %930 = vmatprep.subr.mxu0 0.0
        %931 = vmatpush1.msra.mxu0 0.0
        %932 = vmatprep.subr.mxu0 0.0
        %933 = vmatpush1.msra.mxu0 0.0
        %934 = vmatprep.subr.mxu0 0.0
        %935 = vmatpush1.msra.mxu0 0.0
        %936 = vmatprep.subr.mxu0 0.0
        %937 = vmatpush1.msra.mxu0 0.0
        %938 = vmatprep.subr.mxu0 0.0
        %939 = vmatpush1.msra.mxu0 0.0
        %940 = vmatprep.subr.mxu0 0.0
        %941 = vmatpush1.msra.mxu0 0.0
        %942 = vmatprep.subr.mxu0 0.0
        %943 = vmatpush1.msra.mxu0 0.0
        %944 = vmatprep.subr.mxu0 0.0
        %945 = vmatpush1.msra.mxu0 0.0
        %946 = vmatprep.subr.mxu0 0.0
        %947 = vmatpush1.msra.mxu0 0.0
        %948 = vmatprep.subr.mxu0 0.0
        %949 = vmatpush1.msra.mxu0 0.0
        %950 = vmatprep.subr.mxu0 0.0
        %951 = vmatpush1.msra.mxu0 0.0
        %952 = vmatprep.subr.mxu0 0.0
        %953 = vmatpush1.msra.mxu0 0.0
        %954 = vmatprep.subr.mxu0 0.0
        %955 = vmatpush1.msra.mxu0 0.0
        %956 = vmatprep.subr.mxu0 0.0
        %957 = vmatpush1.msra.mxu0 0.0
        %958 = vmatprep.subr.mxu0 0.0
        %959 = vmatpush1.msra.mxu0 0.0
        %960 = vmatprep.subr.mxu0 0.0
        %961 = vmatpush1.msra.mxu0 0.0
        %962 = vmatprep.subr.mxu0 0.0
        %963 = vmatpush1.msra.mxu0 0.0
        %964 = vmatprep.subr.mxu0 0.0
        %965 = vmatpush1.msra.mxu0 0.0
        %966 = vmatprep.subr.mxu0 0.0
        %967 = vmatpush1.msra.mxu0 0.0
        %968 = vmatprep.mubr.f32.mxu0 0.0
        %969 = vmatmul.mubr.f32.gmra.mrb[0].mxu0 %v899
        %v970 = vpop.f32.mrb[0].mxu0
        %v971 = vadd.f32 0.0, %v970
        %v972 = vpop.f32.mrb[0].mxu0
        %973 = vmatprep.mubr.f32.mxu0 0.0
        %974 = vmatmul.mubr.f32.gmra.mrb[0].mxu0 %v902
        %v975 = vpop.f32.mrb[0].mxu0
        %v976 = vadd.f32 0.0, %v975
        %v977 = vpop.f32.mrb[0].mxu0
        %978 = vdwg.mxu0
        %979 = vrot.lane.b32.xlu0 %v769, 120
        %v980 = vpop.permute.xlu0 %979
        %981 = vrot.lane.b32.xlu0 %v774, 120
        %v982 = vpop.permute.xlu0 %981
        %983 = vrot.lane.b32.xlu0 %v769, 88
        %v984 = vpop.permute.xlu0 %983
        %985 = vrot.lane.b32.xlu0 %v774, 88
        %v986 = vpop.permute.xlu0 %985
        %v987 = vsel %vm783, %v980, 0
        %v989 = vsel %vm783, %v982, 0
        %v991 = vsel %vm783, %v984, 0
        %v993 = vsel %vm783, %v986, 0
        %995 = vmatprep.subr.mxu0 0.0
        %996 = vmatpush1.xpose.msra.mxu0 %v991
        %997 = vmatprep.subr.mxu0 0.0
        %998 = vmatpush1.xpose.msra.mxu0 %v993
        %999 = vmatprep.subr.mxu0 0.0
        %1000 = vmatpush1.xpose.msra.mxu0 0.0
        %1001 = vmatprep.subr.mxu0 0.0
        %1002 = vmatpush1.xpose.msra.mxu0 0.0
        %1003 = vmatprep.subr.mxu0 0.0
        %1004 = vmatpush1.xpose.msra.mxu0 0.0
        %1005 = vmatprep.subr.mxu0 0.0
        %1006 = vmatpush1.xpose.msra.mxu0 0.0
        %1007 = vmatprep.subr.mxu0 0.0
        %1008 = vmatpush1.xpose.msra.mxu0 0.0
        %1009 = vmatprep.subr.mxu0 0.0
        %1010 = vmatpush1.xpose.msra.mxu0 0.0
        %1011 = vmatprep.subr.mxu0 0.0
        %1012 = vmatpush1.xpose.msra.mxu0 0.0
        %1013 = vmatprep.subr.mxu0 0.0
        %1014 = vmatpush1.xpose.msra.mxu0 0.0
        %1015 = vmatprep.subr.mxu0 0.0
        %1016 = vmatpush1.xpose.msra.mxu0 0.0
        %1017 = vmatprep.subr.mxu0 0.0
        %1018 = vmatpush1.xpose.msra.mxu0 0.0
        %1019 = vmatprep.subr.mxu0 0.0
        %1020 = vmatpush1.xpose.msra.mxu0 0.0
        %1021 = vmatprep.subr.mxu0 0.0
        %1022 = vmatpush1.xpose.msra.mxu0 0.0
        %1023 = vmatprep.subr.mxu0 0.0
        %1024 = vmatpush1.xpose.msra.mxu0 0.0
        %1025 = vmatprep.subr.mxu0 0.0
        %1026 = vmatpush1.xpose.msra.mxu0 0.0
        %1027 = vmatprep.subr.mxu0 0.0
        %1028 = vmatpush1.xpose.msra.mxu0 0.0
        %1029 = vmatprep.subr.mxu0 0.0
        %1030 = vmatpush1.xpose.msra.mxu0 0.0
        %1031 = vmatprep.subr.mxu0 0.0
        %1032 = vmatpush1.xpose.msra.mxu0 0.0
        %1033 = vmatprep.subr.mxu0 0.0
        %1034 = vmatpush1.xpose.msra.mxu0 0.0
        %1035 = vmatprep.subr.mxu0 0.0
        %1036 = vmatpush1.xpose.msra.mxu0 0.0
        %1037 = vmatprep.subr.mxu0 0.0
        %1038 = vmatpush1.xpose.msra.mxu0 0.0
        %1039 = vmatprep.subr.mxu0 0.0
        %1040 = vmatpush1.xpose.msra.mxu0 0.0
        %1041 = vmatprep.subr.mxu0 0.0
        %1042 = vmatpush1.xpose.msra.mxu0 0.0
        %1043 = vmatprep.subr.mxu0 0.0
        %1044 = vmatpush1.xpose.msra.mxu0 0.0
        %1045 = vmatprep.subr.mxu0 0.0
        %1046 = vmatpush1.xpose.msra.mxu0 0.0
        %1047 = vmatprep.subr.mxu0 0.0
        %1048 = vmatpush1.xpose.msra.mxu0 0.0
        %1049 = vmatprep.subr.mxu0 0.0
        %1050 = vmatpush1.xpose.msra.mxu0 0.0
        %1051 = vmatprep.subr.mxu0 0.0
        %1052 = vmatpush1.xpose.msra.mxu0 0.0
        %1053 = vmatprep.subr.mxu0 0.0
        %1054 = vmatpush1.xpose.msra.mxu0 0.0
        %1055 = vmatprep.subr.mxu0 0.0
        %1056 = vmatpush1.xpose.msra.mxu0 0.0
        %1057 = vmatprep.subr.mxu0 0.0
        %1058 = vmatpush1.xpose.msra.mxu0 0.0
        %1059 = vmatprep.mubr.f32.mxu0 0.0
        %1060 = vmatmul.mubr.f32.gmra.mrb[0].mxu0 %v987
        %v1061 = vpop.f32.mrb[0].mxu0
        %v1062 = vadd.f32 0.0, %v1061
        %v1063 = vpop.f32.mrb[0].mxu0
        %1064 = vmatprep.mubr.f32.mxu0 0.0
        %1065 = vmatmul.mubr.f32.gmra.mrb[0].mxu0 %v989
        %v1066 = vpop.f32.mrb[0].mxu0
        %v1067 = vadd.f32 0.0, %v1066
        %v1068 = vpop.f32.mrb[0].mxu0
        %1069 = vdwg.mxu0
        %v1070 = vmul.f32 %v1062, 0.35355338
        %v1071 = vmul.f32 %v1067, 0.35355338
        %v1072 = vsel %vm869, %v1070, -inf
        %1073 = vmax.xlane.f32.xlu0 %v1072
        %v1074 = vpop.xlane.xlu0 %1073
        %v1075 = vsel %vm869, %v1071, -inf
        %1076 = vmax.xlane.f32.xlu0 %v1075
        %v1077 = vpop.xlane.xlu0 %1076
        %v1078 = vsub.f32 %v1070, %v1074
        %v1079 = vsub.f32 %v1071, %v1077
        %v1080 = vmul.f32 %v1078, 1.442695
        %v1081 = vpow.pop %v1080
        %v1082 = vmul.f32 %v1079, 1.442695
        %v1083 = vpow.pop %v1082
        %v1084 = vsel %vm869, %v1081, 0.0
        %1085 = vadd.xlane.f32.xlu0 %v1084
        %v1086 = vpop.xlane.xlu0 %1085
        %v1087 = vsel %vm869, %v1083, 0.0
        %1088 = vadd.xlane.f32.xlu0 %v1087
        %v1089 = vpop.xlane.xlu0 %1088
        %v1090 = vrcp.pop %v1086
        %v1091 = vrcp.pop %v1089
        %v1092 = vmul.f32 %v1081, %v1090
        %v1093 = vmul.f32 %v1083, %v1091
        %1094 = vrot.lane.b32.xlu0 %v769, 56
        %v1095 = vpop.permute.xlu0 %1094
        %1096 = vrot.lane.b32.xlu0 %v774, 56
        %v1097 = vpop.permute.xlu0 %1096
        %v1101 = vsel %vm869, %v1092, 0
        %v1104 = vsel %vm869, %v1093, 0
        %1106 = vmatprep.subr.mxu0 0.0
        %1107 = vmatpush1.msra.mxu0 %v1095
        %1108 = vmatprep.subr.mxu0 0.0
        %1109 = vmatpush1.msra.mxu0 %v1097
        %1110 = vmatprep.subr.mxu0 0.0
        %1111 = vmatpush1.msra.mxu0 0.0
        %1112 = vmatprep.subr.mxu0 0.0
        %1113 = vmatpush1.msra.mxu0 0.0
        %1114 = vmatprep.subr.mxu0 0.0
        %1115 = vmatpush1.msra.mxu0 0.0
        %1116 = vmatprep.subr.mxu0 0.0
        %1117 = vmatpush1.msra.mxu0 0.0
        %1118 = vmatprep.subr.mxu0 0.0
        %1119 = vmatpush1.msra.mxu0 0.0
        %1120 = vmatprep.subr.mxu0 0.0
        %1121 = vmatpush1.msra.mxu0 0.0
        %1122 = vmatprep.subr.mxu0 0.0
        %1123 = vmatpush1.msra.mxu0 0.0
        %1124 = vmatprep.subr.mxu0 0.0
        %1125 = vmatpush1.msra.mxu0 0.0
        %1126 = vmatprep.subr.mxu0 0.0
        %1127 = vmatpush1.msra.mxu0 0.0
        %1128 = vmatprep.subr.mxu0 0.0
        %1129 = vmatpush1.msra.mxu0 0.0
        %1130 = vmatprep.subr.mxu0 0.0
        %1131 = vmatpush1.msra.mxu0 0.0
        %1132 = vmatprep.subr.mxu0 0.0
        %1133 = vmatpush1.msra.mxu0 0.0
        %1134 = vmatprep.subr.mxu0 0.0
        %1135 = vmatpush1.msra.mxu0 0.0
        %1136 = vmatprep.subr.mxu0 0.0
        %1137 = vmatpush1.msra.mxu0 0.0
        %1138 = vmatprep.subr.mxu0 0.0
        %1139 = vmatpush1.msra.mxu0 0.0
        %1140 = vmatprep.subr.mxu0 0.0
        %1141 = vmatpush1.msra.mxu0 0.0
        %1142 = vmatprep.subr.mxu0 0.0
        %1143 = vmatpush1.msra.mxu0 0.0
        %1144 = vmatprep.subr.mxu0 0.0
        %1145 = vmatpush1.msra.mxu0 0.0
        %1146 = vmatprep.subr.mxu0 0.0
        %1147 = vmatpush1.msra.mxu0 0.0
        %1148 = vmatprep.subr.mxu0 0.0
        %1149 = vmatpush1.msra.mxu0 0.0
        %1150 = vmatprep.subr.mxu0 0.0
        %1151 = vmatpush1.msra.mxu0 0.0
        %1152 = vmatprep.subr.mxu0 0.0
        %1153 = vmatpush1.msra.mxu0 0.0
        %1154 = vmatprep.subr.mxu0 0.0
        %1155 = vmatpush1.msra.mxu0 0.0
        %1156 = vmatprep.subr.mxu0 0.0
        %1157 = vmatpush1.msra.mxu0 0.0
        %1158 = vmatprep.subr.mxu0 0.0
        %1159 = vmatpush1.msra.mxu0 0.0
        %1160 = vmatprep.subr.mxu0 0.0
        %1161 = vmatpush1.msra.mxu0 0.0
        %1162 = vmatprep.subr.mxu0 0.0
        %1163 = vmatpush1.msra.mxu0 0.0
        %1164 = vmatprep.subr.mxu0 0.0
        %1165 = vmatpush1.msra.mxu0 0.0
        %1166 = vmatprep.subr.mxu0 0.0
        %1167 = vmatpush1.msra.mxu0 0.0
        %1168 = vmatprep.subr.mxu0 0.0
        %1169 = vmatpush1.msra.mxu0 0.0
        %1170 = vmatprep.mubr.f32.mxu0 0.0
        %1171 = vmatmul.mubr.f32.gmra.mrb[0].mxu0 %v1101
        %v1172 = vpop.f32.mrb[0].mxu0
        %v1173 = vadd.f32 0.0, %v1172
        %v1174 = vpop.f32.mrb[0].mxu0
        %1175 = vmatprep.mubr.f32.mxu0 0.0
        %1176 = vmatmul.mubr.f32.gmra.mrb[0].mxu0 %v1104
        %v1177 = vpop.f32.mrb[0].mxu0
        %v1178 = vadd.f32 0.0, %v1177
        %v1179 = vpop.f32.mrb[0].mxu0
        %1180 = vdwg.mxu0
        %1181 = vrot.lane.b32.xlu0 %v769, 112
        %v1182 = vpop.permute.xlu0 %1181
        %1183 = vrot.lane.b32.xlu0 %v774, 112
        %v1184 = vpop.permute.xlu0 %1183
        %1185 = vrot.lane.b32.xlu0 %v769, 80
        %v1186 = vpop.permute.xlu0 %1185
        %1187 = vrot.lane.b32.xlu0 %v774, 80
        %v1188 = vpop.permute.xlu0 %1187
        %v1189 = vsel %vm783, %v1182, 0
        %v1191 = vsel %vm783, %v1184, 0
        %v1193 = vsel %vm783, %v1186, 0
        %v1195 = vsel %vm783, %v1188, 0
        %1197 = vmatprep.subr.mxu0 0.0
        %1198 = vmatpush1.xpose.msra.mxu0 %v1193
        %1199 = vmatprep.subr.mxu0 0.0
        %1200 = vmatpush1.xpose.msra.mxu0 %v1195
        %1201 = vmatprep.subr.mxu0 0.0
        %1202 = vmatpush1.xpose.msra.mxu0 0.0
        %1203 = vmatprep.subr.mxu0 0.0
        %1204 = vmatpush1.xpose.msra.mxu0 0.0
        %1205 = vmatprep.subr.mxu0 0.0
        %1206 = vmatpush1.xpose.msra.mxu0 0.0
        %1207 = vmatprep.subr.mxu0 0.0
        %1208 = vmatpush1.xpose.msra.mxu0 0.0
        %1209 = vmatprep.subr.mxu0 0.0
        %1210 = vmatpush1.xpose.msra.mxu0 0.0
        %1211 = vmatprep.subr.mxu0 0.0
        %1212 = vmatpush1.xpose.msra.mxu0 0.0
        %1213 = vmatprep.subr.mxu0 0.0
        %1214 = vmatpush1.xpose.msra.mxu0 0.0
        %1215 = vmatprep.subr.mxu0 0.0
        %1216 = vmatpush1.xpose.msra.mxu0 0.0
        %1217 = vmatprep.subr.mxu0 0.0
        %1218 = vmatpush1.xpose.msra.mxu0 0.0
        %1219 = vmatprep.subr.mxu0 0.0
        %1220 = vmatpush1.xpose.msra.mxu0 0.0
        %1221 = vmatprep.subr.mxu0 0.0
        %1222 = vmatpush1.xpose.msra.mxu0 0.0
        %1223 = vmatprep.subr.mxu0 0.0
        %1224 = vmatpush1.xpose.msra.mxu0 0.0
        %1225 = vmatprep.subr.mxu0 0.0
        %1226 = vmatpush1.xpose.msra.mxu0 0.0
        %1227 = vmatprep.subr.mxu0 0.0
        %1228 = vmatpush1.xpose.msra.mxu0 0.0
        %1229 = vmatprep.subr.mxu0 0.0
        %1230 = vmatpush1.xpose.msra.mxu0 0.0
        %1231 = vmatprep.subr.mxu0 0.0
        %1232 = vmatpush1.xpose.msra.mxu0 0.0
        %1233 = vmatprep.subr.mxu0 0.0
        %1234 = vmatpush1.xpose.msra.mxu0 0.0
        %1235 = vmatprep.subr.mxu0 0.0
        %1236 = vmatpush1.xpose.msra.mxu0 0.0
        %1237 = vmatprep.subr.mxu0 0.0
        %1238 = vmatpush1.xpose.msra.mxu0 0.0
        %1239 = vmatprep.subr.mxu0 0.0
        %1240 = vmatpush1.xpose.msra.mxu0 0.0
        %1241 = vmatprep.subr.mxu0 0.0
        %1242 = vmatpush1.xpose.msra.mxu0 0.0
        %1243 = vmatprep.subr.mxu0 0.0
        %1244 = vmatpush1.xpose.msra.mxu0 0.0
        %1245 = vmatprep.subr.mxu0 0.0
        %1246 = vmatpush1.xpose.msra.mxu0 0.0
        %1247 = vmatprep.subr.mxu0 0.0
        %1248 = vmatpush1.xpose.msra.mxu0 0.0
        %1249 = vmatprep.subr.mxu0 0.0
        %1250 = vmatpush1.xpose.msra.mxu0 0.0
        %1251 = vmatprep.subr.mxu0 0.0
        %1252 = vmatpush1.xpose.msra.mxu0 0.0
        %1253 = vmatprep.subr.mxu0 0.0
        %1254 = vmatpush1.xpose.msra.mxu0 0.0
        %1255 = vmatprep.subr.mxu0 0.0
        %1256 = vmatpush1.xpose.msra.mxu0 0.0
        %1257 = vmatprep.subr.mxu0 0.0
        %1258 = vmatpush1.xpose.msra.mxu0 0.0
        %1259 = vmatprep.subr.mxu0 0.0
        %1260 = vmatpush1.xpose.msra.mxu0 0.0
        %1261 = vmatprep.mubr.f32.mxu0 0.0
        %1262 = vmatmul.mubr.f32.gmra.mrb[0].mxu0 %v1189
        %v1263 = vpop.f32.mrb[0].mxu0
        %v1264 = vadd.f32 0.0, %v1263
        %v1265 = vpop.f32.mrb[0].mxu0
        %1266 = vmatprep.mubr.f32.mxu0 0.0
        %1267 = vmatmul.mubr.f32.gmra.mrb[0].mxu0 %v1191
        %v1268 = vpop.f32.mrb[0].mxu0
        %v1269 = vadd.f32 0.0, %v1268
        %v1270 = vpop.f32.mrb[0].mxu0
        %1271 = vdwg.mxu0
        %v1272 = vmul.f32 %v1264, 0.35355338
        %v1273 = vmul.f32 %v1269, 0.35355338
        %v1274 = vsel %vm869, %v1272, -inf
        %1275 = vmax.xlane.f32.xlu0 %v1274
        %v1276 = vpop.xlane.xlu0 %1275
        %v1277 = vsel %vm869, %v1273, -inf
        %1278 = vmax.xlane.f32.xlu0 %v1277
        %v1279 = vpop.xlane.xlu0 %1278
        %v1280 = vsub.f32 %v1272, %v1276
        %v1281 = vsub.f32 %v1273, %v1279
        %v1282 = vmul.f32 %v1280, 1.442695
        %v1283 = vpow.pop %v1282
        %v1284 = vmul.f32 %v1281, 1.442695
        %v1285 = vpow.pop %v1284
        %v1286 = vsel %vm869, %v1283, 0.0
        %1287 = vadd.xlane.f32.xlu0 %v1286
        %v1288 = vpop.xlane.xlu0 %1287
        %v1289 = vsel %vm869, %v1285, 0.0
        %1290 = vadd.xlane.f32.xlu0 %v1289
        %v1291 = vpop.xlane.xlu0 %1290
        %v1292 = vrcp.pop %v1288
        %v1293 = vrcp.pop %v1291
        %v1294 = vmul.f32 %v1283, %v1292
        %v1295 = vmul.f32 %v1285, %v1293
        %1296 = vrot.lane.b32.xlu0 %v769, 48
        %v1297 = vpop.permute.xlu0 %1296
        %1298 = vrot.lane.b32.xlu0 %v774, 48
        %v1299 = vpop.permute.xlu0 %1298
        %v1303 = vsel %vm869, %v1294, 0
        %v1306 = vsel %vm869, %v1295, 0
        %1308 = vmatprep.subr.mxu0 0.0
        %1309 = vmatpush1.msra.mxu0 %v1297
        %1310 = vmatprep.subr.mxu0 0.0
        %1311 = vmatpush1.msra.mxu0 %v1299
        %1312 = vmatprep.subr.mxu0 0.0
        %1313 = vmatpush1.msra.mxu0 0.0
        %1314 = vmatprep.subr.mxu0 0.0
        %1315 = vmatpush1.msra.mxu0 0.0
        %1316 = vmatprep.subr.mxu0 0.0
        %1317 = vmatpush1.msra.mxu0 0.0
        %1318 = vmatprep.subr.mxu0 0.0
        %1319 = vmatpush1.msra.mxu0 0.0
        %1320 = vmatprep.subr.mxu0 0.0
        %1321 = vmatpush1.msra.mxu0 0.0
        %1322 = vmatprep.subr.mxu0 0.0
        %1323 = vmatpush1.msra.mxu0 0.0
        %1324 = vmatprep.subr.mxu0 0.0
        %1325 = vmatpush1.msra.mxu0 0.0
        %1326 = vmatprep.subr.mxu0 0.0
        %1327 = vmatpush1.msra.mxu0 0.0
        %1328 = vmatprep.subr.mxu0 0.0
        %1329 = vmatpush1.msra.mxu0 0.0
        %1330 = vmatprep.subr.mxu0 0.0
        %1331 = vmatpush1.msra.mxu0 0.0
        %1332 = vmatprep.subr.mxu0 0.0
        %1333 = vmatpush1.msra.mxu0 0.0
        %1334 = vmatprep.subr.mxu0 0.0
        %1335 = vmatpush1.msra.mxu0 0.0
        %1336 = vmatprep.subr.mxu0 0.0
        %1337 = vmatpush1.msra.mxu0 0.0
        %1338 = vmatprep.subr.mxu0 0.0
        %1339 = vmatpush1.msra.mxu0 0.0
        %1340 = vmatprep.subr.mxu0 0.0
        %1341 = vmatpush1.msra.mxu0 0.0
        %1342 = vmatprep.subr.mxu0 0.0
        %1343 = vmatpush1.msra.mxu0 0.0
        %1344 = vmatprep.subr.mxu0 0.0
        %1345 = vmatpush1.msra.mxu0 0.0
        %1346 = vmatprep.subr.mxu0 0.0
        %1347 = vmatpush1.msra.mxu0 0.0
        %1348 = vmatprep.subr.mxu0 0.0
        %1349 = vmatpush1.msra.mxu0 0.0
        %1350 = vmatprep.subr.mxu0 0.0
        %1351 = vmatpush1.msra.mxu0 0.0
        %1352 = vmatprep.subr.mxu0 0.0
        %1353 = vmatpush1.msra.mxu0 0.0
        %1354 = vmatprep.subr.mxu0 0.0
        %1355 = vmatpush1.msra.mxu0 0.0
        %1356 = vmatprep.subr.mxu0 0.0
        %1357 = vmatpush1.msra.mxu0 0.0
        %1358 = vmatprep.subr.mxu0 0.0
        %1359 = vmatpush1.msra.mxu0 0.0
        %1360 = vmatprep.subr.mxu0 0.0
        %1361 = vmatpush1.msra.mxu0 0.0
        %1362 = vmatprep.subr.mxu0 0.0
        %1363 = vmatpush1.msra.mxu0 0.0
        %1364 = vmatprep.subr.mxu0 0.0
        %1365 = vmatpush1.msra.mxu0 0.0
        %1366 = vmatprep.subr.mxu0 0.0
        %1367 = vmatpush1.msra.mxu0 0.0
        %1368 = vmatprep.subr.mxu0 0.0
        %1369 = vmatpush1.msra.mxu0 0.0
        %1370 = vmatprep.subr.mxu0 0.0
        %1371 = vmatpush1.msra.mxu0 0.0
        %1372 = vmatprep.mubr.f32.mxu0 0.0
        %1373 = vmatmul.mubr.f32.gmra.mrb[0].mxu0 %v1303
        %v1374 = vpop.f32.mrb[0].mxu0
        %v1375 = vadd.f32 0.0, %v1374
        %v1376 = vpop.f32.mrb[0].mxu0
        %1377 = vmatprep.mubr.f32.mxu0 0.0
        %1378 = vmatmul.mubr.f32.gmra.mrb[0].mxu0 %v1306
        %v1379 = vpop.f32.mrb[0].mxu0
        %v1380 = vadd.f32 0.0, %v1379
        %v1381 = vpop.f32.mrb[0].mxu0
        %1382 = vdwg.mxu0
        %1383 = vrot.lane.b32.xlu0 %v769, 104
        %v1384 = vpop.permute.xlu0 %1383
        %1385 = vrot.lane.b32.xlu0 %v774, 104
        %v1386 = vpop.permute.xlu0 %1385
        %1387 = vrot.lane.b32.xlu0 %v769, 72
        %v1388 = vpop.permute.xlu0 %1387
        %1389 = vrot.lane.b32.xlu0 %v774, 72
        %v1390 = vpop.permute.xlu0 %1389
        %v1391 = vsel %vm783, %v1384, 0
        %v1393 = vsel %vm783, %v1386, 0
        %v1395 = vsel %vm783, %v1388, 0
        %v1397 = vsel %vm783, %v1390, 0
        %1399 = vmatprep.subr.mxu0 0.0
        %1400 = vmatpush1.xpose.msra.mxu0 %v1395
        %1401 = vmatprep.subr.mxu0 0.0
        %1402 = vmatpush1.xpose.msra.mxu0 %v1397
        %1403 = vmatprep.subr.mxu0 0.0
        %1404 = vmatpush1.xpose.msra.mxu0 0.0
        %1405 = vmatprep.subr.mxu0 0.0
        %1406 = vmatpush1.xpose.msra.mxu0 0.0
        %1407 = vmatprep.subr.mxu0 0.0
        %1408 = vmatpush1.xpose.msra.mxu0 0.0
        %1409 = vmatprep.subr.mxu0 0.0
        %1410 = vmatpush1.xpose.msra.mxu0 0.0
        %1411 = vmatprep.subr.mxu0 0.0
        %1412 = vmatpush1.xpose.msra.mxu0 0.0
        %1413 = vmatprep.subr.mxu0 0.0
        %1414 = vmatpush1.xpose.msra.mxu0 0.0
        %1415 = vmatprep.subr.mxu0 0.0
        %1416 = vmatpush1.xpose.msra.mxu0 0.0
        %1417 = vmatprep.subr.mxu0 0.0
        %1418 = vmatpush1.xpose.msra.mxu0 0.0
        %1419 = vmatprep.subr.mxu0 0.0
        %1420 = vmatpush1.xpose.msra.mxu0 0.0
        %1421 = vmatprep.subr.mxu0 0.0
        %1422 = vmatpush1.xpose.msra.mxu0 0.0
        %1423 = vmatprep.subr.mxu0 0.0
        %1424 = vmatpush1.xpose.msra.mxu0 0.0
        %1425 = vmatprep.subr.mxu0 0.0
        %1426 = vmatpush1.xpose.msra.mxu0 0.0
        %1427 = vmatprep.subr.mxu0 0.0
        %1428 = vmatpush1.xpose.msra.mxu0 0.0
        %1429 = vmatprep.subr.mxu0 0.0
        %1430 = vmatpush1.xpose.msra.mxu0 0.0
        %1431 = vmatprep.subr.mxu0 0.0
        %1432 = vmatpush1.xpose.msra.mxu0 0.0
        %1433 = vmatprep.subr.mxu0 0.0
        %1434 = vmatpush1.xpose.msra.mxu0 0.0
        %1435 = vmatprep.subr.mxu0 0.0
        %1436 = vmatpush1.xpose.msra.mxu0 0.0
        %1437 = vmatprep.subr.mxu0 0.0
        %1438 = vmatpush1.xpose.msra.mxu0 0.0
        %1439 = vmatprep.subr.mxu0 0.0
        %1440 = vmatpush1.xpose.msra.mxu0 0.0
        %1441 = vmatprep.subr.mxu0 0.0
        %1442 = vmatpush1.xpose.msra.mxu0 0.0
        %1443 = vmatprep.subr.mxu0 0.0
        %1444 = vmatpush1.xpose.msra.mxu0 0.0
        %1445 = vmatprep.subr.mxu0 0.0
        %1446 = vmatpush1.xpose.msra.mxu0 0.0
        %1447 = vmatprep.subr.mxu0 0.0
        %1448 = vmatpush1.xpose.msra.mxu0 0.0
        %1449 = vmatprep.subr.mxu0 0.0
        %1450 = vmatpush1.xpose.msra.mxu0 0.0
        %1451 = vmatprep.subr.mxu0 0.0
        %1452 = vmatpush1.xpose.msra.mxu0 0.0
        %1453 = vmatprep.subr.mxu0 0.0
        %1454 = vmatpush1.xpose.msra.mxu0 0.0
        %1455 = vmatprep.subr.mxu0 0.0
        %1456 = vmatpush1.xpose.msra.mxu0 0.0
        %1457 = vmatprep.subr.mxu0 0.0
        %1458 = vmatpush1.xpose.msra.mxu0 0.0
        %1459 = vmatprep.subr.mxu0 0.0
        %1460 = vmatpush1.xpose.msra.mxu0 0.0
        %1461 = vmatprep.subr.mxu0 0.0
        %1462 = vmatpush1.xpose.msra.mxu0 0.0
        %1463 = vmatprep.mubr.f32.mxu0 0.0
        %1464 = vmatmul.mubr.f32.gmra.mrb[0].mxu0 %v1391
        %v1465 = vpop.f32.mrb[0].mxu0
        %v1466 = vadd.f32 0.0, %v1465
        %v1467 = vpop.f32.mrb[0].mxu0
        %1468 = vmatprep.mubr.f32.mxu0 0.0
        %1469 = vmatmul.mubr.f32.gmra.mrb[0].mxu0 %v1393
        %v1470 = vpop.f32.mrb[0].mxu0
        %v1471 = vadd.f32 0.0, %v1470
        %v1472 = vpop.f32.mrb[0].mxu0
        %1473 = vdwg.mxu0
        %v1474 = vmul.f32 %v1466, 0.35355338
        %v1475 = vmul.f32 %v1471, 0.35355338
        %v1476 = vsel %vm869, %v1474, -inf
        %1477 = vmax.xlane.f32.xlu0 %v1476
        %v1478 = vpop.xlane.xlu0 %1477
        %v1479 = vsel %vm869, %v1475, -inf
        %1480 = vmax.xlane.f32.xlu0 %v1479
        %v1481 = vpop.xlane.xlu0 %1480
        %v1482 = vsub.f32 %v1474, %v1478
        %v1483 = vsub.f32 %v1475, %v1481
        %v1484 = vmul.f32 %v1482, 1.442695
        %v1485 = vpow.pop %v1484
        %v1486 = vmul.f32 %v1483, 1.442695
        %v1487 = vpow.pop %v1486
        %v1488 = vsel %vm869, %v1485, 0.0
        %1489 = vadd.xlane.f32.xlu0 %v1488
        %v1490 = vpop.xlane.xlu0 %1489
        %v1491 = vsel %vm869, %v1487, 0.0
        %1492 = vadd.xlane.f32.xlu0 %v1491
        %v1493 = vpop.xlane.xlu0 %1492
        %v1494 = vrcp.pop %v1490
        %v1495 = vrcp.pop %v1493
        %v1496 = vmul.f32 %v1485, %v1494
        %v1497 = vmul.f32 %v1487, %v1495
        %1498 = vrot.lane.b32.xlu0 %v769, 40
        %v1499 = vpop.permute.xlu0 %1498
        %1500 = vrot.lane.b32.xlu0 %v774, 40
        %v1501 = vpop.permute.xlu0 %1500
        %v1505 = vsel %vm869, %v1496, 0
        %v1508 = vsel %vm869, %v1497, 0
        %1510 = vmatprep.subr.mxu0 0.0
        %1511 = vmatpush1.msra.mxu0 %v1499
        %1512 = vmatprep.subr.mxu0 0.0
        %1513 = vmatpush1.msra.mxu0 %v1501
        %1514 = vmatprep.subr.mxu0 0.0
        %1515 = vmatpush1.msra.mxu0 0.0
        %1516 = vmatprep.subr.mxu0 0.0
        %1517 = vmatpush1.msra.mxu0 0.0
        %1518 = vmatprep.subr.mxu0 0.0
        %1519 = vmatpush1.msra.mxu0 0.0
        %1520 = vmatprep.subr.mxu0 0.0
        %1521 = vmatpush1.msra.mxu0 0.0
        %1522 = vmatprep.subr.mxu0 0.0
        %1523 = vmatpush1.msra.mxu0 0.0
        %1524 = vmatprep.subr.mxu0 0.0
        %1525 = vmatpush1.msra.mxu0 0.0
        %1526 = vmatprep.subr.mxu0 0.0
        %1527 = vmatpush1.msra.mxu0 0.0
        %1528 = vmatprep.subr.mxu0 0.0
        %1529 = vmatpush1.msra.mxu0 0.0
        %1530 = vmatprep.subr.mxu0 0.0
        %1531 = vmatpush1.msra.mxu0 0.0
        %1532 = vmatprep.subr.mxu0 0.0
        %1533 = vmatpush1.msra.mxu0 0.0
        %1534 = vmatprep.subr.mxu0 0.0
        %1535 = vmatpush1.msra.mxu0 0.0
        %1536 = vmatprep.subr.mxu0 0.0
        %1537 = vmatpush1.msra.mxu0 0.0
        %1538 = vmatprep.subr.mxu0 0.0
        %1539 = vmatpush1.msra.mxu0 0.0
        %1540 = vmatprep.subr.mxu0 0.0
        %1541 = vmatpush1.msra.mxu0 0.0
        %1542 = vmatprep.subr.mxu0 0.0
        %1543 = vmatpush1.msra.mxu0 0.0
        %1544 = vmatprep.subr.mxu0 0.0
        %1545 = vmatpush1.msra.mxu0 0.0
        %1546 = vmatprep.subr.mxu0 0.0
        %1547 = vmatpush1.msra.mxu0 0.0
        %1548 = vmatprep.subr.mxu0 0.0
        %1549 = vmatpush1.msra.mxu0 0.0
        %1550 = vmatprep.subr.mxu0 0.0
        %1551 = vmatpush1.msra.mxu0 0.0
        %1552 = vmatprep.subr.mxu0 0.0
        %1553 = vmatpush1.msra.mxu0 0.0
        %1554 = vmatprep.subr.mxu0 0.0
        %1555 = vmatpush1.msra.mxu0 0.0
        %1556 = vmatprep.subr.mxu0 0.0
        %1557 = vmatpush1.msra.mxu0 0.0
        %1558 = vmatprep.subr.mxu0 0.0
        %1559 = vmatpush1.msra.mxu0 0.0
        %1560 = vmatprep.subr.mxu0 0.0
        %1561 = vmatpush1.msra.mxu0 0.0
        %1562 = vmatprep.subr.mxu0 0.0
        %1563 = vmatpush1.msra.mxu0 0.0
        %1564 = vmatprep.subr.mxu0 0.0
        %1565 = vmatpush1.msra.mxu0 0.0
        %1566 = vmatprep.subr.mxu0 0.0
        %1567 = vmatpush1.msra.mxu0 0.0
        %1568 = vmatprep.subr.mxu0 0.0
        %1569 = vmatpush1.msra.mxu0 0.0
        %1570 = vmatprep.subr.mxu0 0.0
        %1571 = vmatpush1.msra.mxu0 0.0
        %1572 = vmatprep.subr.mxu0 0.0
        %1573 = vmatpush1.msra.mxu0 0.0
        %1574 = vmatprep.mubr.f32.mxu0 0.0
        %1575 = vmatmul.mubr.f32.gmra.mrb[0].mxu0 %v1505
        %v1576 = vpop.f32.mrb[0].mxu0
        %v1577 = vadd.f32 0.0, %v1576
        %v1578 = vpop.f32.mrb[0].mxu0
        %1579 = vmatprep.mubr.f32.mxu0 0.0
        %1580 = vmatmul.mubr.f32.gmra.mrb[0].mxu0 %v1508
        %v1581 = vpop.f32.mrb[0].mxu0
        %v1582 = vadd.f32 0.0, %v1581
        %v1583 = vpop.f32.mrb[0].mxu0
        %1584 = vdwg.mxu0
        %1587 = vrot.lane.b32.xlu0 %v1173, 8
        %v1588 = vpop.permute.xlu0 %1587
        %1589 = vrot.lane.b32.xlu0 %v1178, 8
        %v1590 = vpop.permute.xlu0 %1589
        %1595 = vrot.lane.b32.xlu0 %v1375, 16
        %v1596 = vpop.permute.xlu0 %1595
        %1597 = vrot.lane.b32.xlu0 %v1380, 16
        %v1598 = vpop.permute.xlu0 %1597
        %1603 = vrot.lane.b32.xlu0 %v1577, 24
        %v1604 = vpop.permute.xlu0 %1603
        %1605 = vrot.lane.b32.xlu0 %v1582, 24
        %v1606 = vpop.permute.xlu0 %1605
        %v1609 = vsel %vm783, %v971, %v1588
        %v1610 = vsel %vm783, %v976, %v1590
        %v1611 = vsel %vm869, %v1609, %v1596
        %v1612 = vsel %vm869, %v1610, %v1598
        %vm1613 = vcmask 195584
        %v1614 = vsel %vm1613, %v1611, %v1604
        %v1615 = vsel %vm1613, %v1612, %v1606
        %v1616 = vld [vmem:[%s7] sm:$0xff]
        %v1617 = vld [vmem:[%s7 + $0x8] sm:$0xff]
        %v1618 = vld [vmem:[%s7 + $0x10] sm:$0xff]
        %v1619 = vld [vmem:[%s7 + $0x18] sm:$0xff]
        %v1620 = vld [vmem:[%s8] sm:$0x1]
        %v1622 = vlaneseq
        %v1623 = vshrl.u32 %v1622, 7
        %v1624 = vsub.s32 0, %v1623
        %v1625 = vrot.slane %v1620, %v1624
        %v1628 = vsel %vm641, %v1614, 0
        %v1631 = vsel %vm641, %v1615, 0
        %1633 = vmatprep.subr.mxu0 0.0
        %1634 = vmatpush1.msra.mxu0 %v1616
        %1635 = vmatprep.subr.mxu0 0.0
        %1636 = vmatpush1.msra.mxu0 %v1617
        %1637 = vmatprep.subr.mxu0 0.0
        %1638 = vmatpush1.msra.mxu0 %v1618
        %1639 = vmatprep.subr.mxu0 0.0
        %1640 = vmatpush1.msra.mxu0 %v1619
        %1641 = vmatprep.subr.mxu0 0.0
        %1642 = vmatpush1.msra.mxu0 0.0
        %1643 = vmatprep.subr.mxu0 0.0
        %1644 = vmatpush1.msra.mxu0 0.0
        %1645 = vmatprep.subr.mxu0 0.0
        %1646 = vmatpush1.msra.mxu0 0.0
        %1647 = vmatprep.subr.mxu0 0.0
        %1648 = vmatpush1.msra.mxu0 0.0
        %1649 = vmatprep.subr.mxu0 0.0
        %1650 = vmatpush1.msra.mxu0 0.0
        %1651 = vmatprep.subr.mxu0 0.0
        %1652 = vmatpush1.msra.mxu0 0.0
        %1653 = vmatprep.subr.mxu0 0.0
        %1654 = vmatpush1.msra.mxu0 0.0
        %1655 = vmatprep.subr.mxu0 0.0
        %1656 = vmatpush1.msra.mxu0 0.0
        %1657 = vmatprep.subr.mxu0 0.0
        %1658 = vmatpush1.msra.mxu0 0.0
        %1659 = vmatprep.subr.mxu0 0.0
        %1660 = vmatpush1.msra.mxu0 0.0
        %1661 = vmatprep.subr.mxu0 0.0
        %1662 = vmatpush1.msra.mxu0 0.0
        %1663 = vmatprep.subr.mxu0 0.0
        %1664 = vmatpush1.msra.mxu0 0.0
        %1665 = vmatprep.subr.mxu0 0.0
        %1666 = vmatpush1.msra.mxu0 0.0
        %1667 = vmatprep.subr.mxu0 0.0
        %1668 = vmatpush1.msra.mxu0 0.0
        %1669 = vmatprep.subr.mxu0 0.0
        %1670 = vmatpush1.msra.mxu0 0.0
        %1671 = vmatprep.subr.mxu0 0.0
        %1672 = vmatpush1.msra.mxu0 0.0
        %1673 = vmatprep.subr.mxu0 0.0
        %1674 = vmatpush1.msra.mxu0 0.0
        %1675 = vmatprep.subr.mxu0 0.0
        %1676 = vmatpush1.msra.mxu0 0.0
        %1677 = vmatprep.subr.mxu0 0.0
        %1678 = vmatpush1.msra.mxu0 0.0
        %1679 = vmatprep.subr.mxu0 0.0
        %1680 = vmatpush1.msra.mxu0 0.0
        %1681 = vmatprep.subr.mxu0 0.0
        %1682 = vmatpush1.msra.mxu0 0.0
        %1683 = vmatprep.subr.mxu0 0.0
        %1684 = vmatpush1.msra.mxu0 0.0
        %1685 = vmatprep.subr.mxu0 0.0
        %1686 = vmatpush1.msra.mxu0 0.0
        %1687 = vmatprep.subr.mxu0 0.0
        %1688 = vmatpush1.msra.mxu0 0.0
        %1689 = vmatprep.subr.mxu0 0.0
        %1690 = vmatpush1.msra.mxu0 0.0
        %1691 = vmatprep.subr.mxu0 0.0
        %1692 = vmatpush1.msra.mxu0 0.0
        %1693 = vmatprep.subr.mxu0 0.0
        %1694 = vmatpush1.msra.mxu0 0.0
        %1695 = vmatprep.subr.mxu0 0.0
        %1696 = vmatpush1.msra.mxu0 0.0
        %1697 = vmatprep.mubr.f32.mxu0 0.0
        %1698 = vmatmul.mubr.f32.gmra.mrb[0].mxu0 %v1628
        %v1699 = vpop.f32.mrb[0].mxu0
        %v1700 = vadd.f32 %v1625, %v1699
        %v1701 = vpop.f32.mrb[0].mxu0
        %1702 = vmatprep.mubr.f32.mxu0 0.0
        %1703 = vmatmul.mubr.f32.gmra.mrb[0].mxu0 %v1631
        %v1704 = vpop.f32.mrb[0].mxu0
        %v1705 = vadd.f32 %v1625, %v1704
        %v1706 = vpop.f32.mrb[0].mxu0
        %1707 = vdwg.mxu0
        %v1708 = vadd.f32 %v631, %v1700
        %v1709 = vadd.f32 %v636, %v1705
        %v1710 = vld [vmem:[%s9] sm:$0x1]
        %v1711 = vld [vmem:[%s10] sm:$0x1]
        %v1712 = vsel %vm641, %v1708, 0.0
        %1713 = vadd.xlane.f32.xlu0 %v1712
        %v1714 = vpop.xlane.xlu0 %1713
        %v1715 = vsel %vm641, %v1709, 0.0
        %1716 = vadd.xlane.f32.xlu0 %v1715
        %v1717 = vpop.xlane.xlu0 %1716
        %v1718 = vmul.f32 %v1714, %v648
        %v1719 = vmul.f32 %v1717, %v648
        %v1720 = vsub.f32 %v1708, %v1718
        %v1721 = vsub.f32 %v1709, %v1719
        %v1722 = vmul.f32 %v1720, %v1720
        %v1723 = vmul.f32 %v1721, %v1721
        %v1724 = vsel %vm641, %v1722, 0.0
        %1725 = vadd.xlane.f32.xlu0 %v1724
        %v1726 = vpop.xlane.xlu0 %1725
        %v1727 = vsel %vm641, %v1723, 0.0
        %1728 = vadd.xlane.f32.xlu0 %v1727
        %v1729 = vpop.xlane.xlu0 %1728
        %v1730 = vmul.f32 %v1726, %v648
        %v1731 = vmul.f32 %v1729, %v648
        %v1732 = vadd.f32 %v1730, 1e-06
        %v1733 = vadd.f32 %v1731, 1e-06
        %v1734 = vrsqrt.pop %v1732
        %v1735 = vrsqrt.pop %v1733
        %v1736 = vmul.f32 %v1720, %v1734
        %v1737 = vmul.f32 %v1721, %v1735
        %v1739 = vlaneseq
        %v1740 = vshrl.u32 %v1739, 7
        %v1741 = vsub.s32 0, %v1740
        %v1742 = vrot.slane %v1710, %v1741
        %v1744 = vmul.f32 %v1736, %v1742
        %v1745 = vmul.f32 %v1737, %v1742
        %v1747 = vlaneseq
        %v1748 = vshrl.u32 %v1747, 7
        %v1749 = vsub.s32 0, %v1748
        %v1750 = vrot.slane %v1711, %v1749
        %v1752 = vadd.f32 %v1744, %v1750
        %v1753 = vadd.f32 %v1745, %v1750
        %v1754 = vld [vmem:[%s11] sm:$0xff]
        %v1755 = vld [vmem:[%s11 + $0x8] sm:$0xff]
        %v1756 = vld [vmem:[%s11 + $0x10] sm:$0xff]
        %v1757 = vld [vmem:[%s11 + $0x18] sm:$0xff]
        %v1758 = vld [vmem:[%s12] sm:$0x1]
        %v1760 = vlaneseq
        %v1761 = vshrl.u32 %v1760, 7
        %v1762 = vsub.s32 0, %v1761
        %v1763 = vrot.slane %v1758, %v1762
        %v1766 = vsel %vm641, %v1752, 0
        %v1769 = vsel %vm641, %v1753, 0
        %1771 = vmatprep.subr.mxu0 0.0
        %1772 = vmatpush1.msra.mxu0 %v1754
        %1773 = vmatprep.subr.mxu0 0.0
        %1774 = vmatpush1.msra.mxu0 %v1755
        %1775 = vmatprep.subr.mxu0 0.0
        %1776 = vmatpush1.msra.mxu0 %v1756
        %1777 = vmatprep.subr.mxu0 0.0
        %1778 = vmatpush1.msra.mxu0 %v1757
        %1779 = vmatprep.subr.mxu0 0.0
        %1780 = vmatpush1.msra.mxu0 0.0
        %1781 = vmatprep.subr.mxu0 0.0
        %1782 = vmatpush1.msra.mxu0 0.0
        %1783 = vmatprep.subr.mxu0 0.0
        %1784 = vmatpush1.msra.mxu0 0.0
        %1785 = vmatprep.subr.mxu0 0.0
        %1786 = vmatpush1.msra.mxu0 0.0
        %1787 = vmatprep.subr.mxu0 0.0
        %1788 = vmatpush1.msra.mxu0 0.0
        %1789 = vmatprep.subr.mxu0 0.0
        %1790 = vmatpush1.msra.mxu0 0.0
        %1791 = vmatprep.subr.mxu0 0.0
        %1792 = vmatpush1.msra.mxu0 0.0
        %1793 = vmatprep.subr.mxu0 0.0
        %1794 = vmatpush1.msra.mxu0 0.0
        %1795 = vmatprep.subr.mxu0 0.0
        %1796 = vmatpush1.msra.mxu0 0.0
        %1797 = vmatprep.subr.mxu0 0.0
        %1798 = vmatpush1.msra.mxu0 0.0
        %1799 = vmatprep.subr.mxu0 0.0
        %1800 = vmatpush1.msra.mxu0 0.0
        %1801 = vmatprep.subr.mxu0 0.0
        %1802 = vmatpush1.msra.mxu0 0.0
        %1803 = vmatprep.subr.mxu0 0.0
        %1804 = vmatpush1.msra.mxu0 0.0
        %1805 = vmatprep.subr.mxu0 0.0
        %1806 = vmatpush1.msra.mxu0 0.0
        %1807 = vmatprep.subr.mxu0 0.0
        %1808 = vmatpush1.msra.mxu0 0.0
        %1809 = vmatprep.subr.mxu0 0.0
        %1810 = vmatpush1.msra.mxu0 0.0
        %1811 = vmatprep.subr.mxu0 0.0
        %1812 = vmatpush1.msra.mxu0 0.0
        %1813 = vmatprep.subr.mxu0 0.0
        %1814 = vmatpush1.msra.mxu0 0.0
        %1815 = vmatprep.subr.mxu0 0.0
        %1816 = vmatpush1.msra.mxu0 0.0
        %1817 = vmatprep.subr.mxu0 0.0
        %1818 = vmatpush1.msra.mxu0 0.0
        %1819 = vmatprep.subr.mxu0 0.0
        %1820 = vmatpush1.msra.mxu0 0.0
        %1821 = vmatprep.subr.mxu0 0.0
        %1822 = vmatpush1.msra.mxu0 0.0
        %1823 = vmatprep.subr.mxu0 0.0
        %1824 = vmatpush1.msra.mxu0 0.0
        %1825 = vmatprep.subr.mxu0 0.0
        %1826 = vmatpush1.msra.mxu0 0.0
        %1827 = vmatprep.subr.mxu0 0.0
        %1828 = vmatpush1.msra.mxu0 0.0
        %1829 = vmatprep.subr.mxu0 0.0
        %1830 = vmatpush1.msra.mxu0 0.0
        %1831 = vmatprep.subr.mxu0 0.0
        %1832 = vmatpush1.msra.mxu0 0.0
        %1833 = vmatprep.subr.mxu0 0.0
        %1834 = vmatpush1.msra.mxu0 0.0
        %1835 = vmatprep.mubr.f32.mxu0 0.0
        %1836 = vmatmul.mubr.f32.gmra.mrb[0].mxu0 %v1766
        %v1837 = vpop.f32.mrb[0].mxu0
        %v1838 = vadd.f32 %v1763, %v1837
        %v1839 = vpop.f32.mrb[0].mxu0
        %1840 = vmatprep.mubr.f32.mxu0 0.0
        %1841 = vmatmul.mubr.f32.gmra.mrb[0].mxu0 %v1769
        %v1842 = vpop.f32.mrb[0].mxu0
        %v1843 = vadd.f32 %v1763, %v1842
        %v1844 = vpop.f32.mrb[0].mxu0
        %1845 = vdwg.mxu0
        %v1846 = vmul.f32 %v1838, 0.5
        %v1847 = vmul.f32 %v1843, 0.5
        %v1848 = vmul.f32 %v1838, 0.044715
        %v1849 = vmul.f32 %v1843, 0.044715
        %v1850 = vmul.f32 %v1848, %v1838
        %v1851 = vmul.f32 %v1849, %v1843
        %v1852 = vmul.f32 %v1850, %v1838
        %v1853 = vmul.f32 %v1851, %v1843
        %v1854 = vadd.f32 %v1838, %v1852
        %v1855 = vadd.f32 %v1843, %v1853
        %v1856 = vmul.f32 %v1854, 0.7978846
        %v1857 = vmul.f32 %v1855, 0.7978846
        %v1858 = vtanh.pop %v1856
        %v1859 = vtanh.pop %v1857
        %v1860 = vadd.f32 %v1858, 1.0
        %v1861 = vadd.f32 %v1859, 1.0
        %v1862 = vmul.f32 %v1846, %v1860
        %v1863 = vmul.f32 %v1847, %v1861
        %v1864 = vld [vmem:[%s13] sm:$0xff]
        %v1865 = vld [vmem:[%s13 + $0x8] sm:$0xff]
        %v1866 = vld [vmem:[%s13 + $0x10] sm:$0xff]
        %v1867 = vld [vmem:[%s13 + $0x18] sm:$0xff]
        %v1868 = vld [vmem:[%s13 + $0x20] sm:$0xff]
        %v1869 = vld [vmem:[%s13 + $0x28] sm:$0xff]
        %v1870 = vld [vmem:[%s13 + $0x30] sm:$0xff]
        %v1871 = vld [vmem:[%s13 + $0x38] sm:$0xff]
        %v1872 = vld [vmem:[%s14] sm:$0x1]
        %v1874 = vlaneseq
        %v1875 = vshrl.u32 %v1874, 7
        %v1876 = vsub.s32 0, %v1875
        %v1877 = vrot.slane %v1872, %v1876
        %vm1879 = vcmask 523264
        %v1881 = vsel %vm1879, %v1862, 0
        %v1884 = vsel %vm1879, %v1863, 0
        %1886 = vmatprep.subr.mxu0 0.0
        %1887 = vmatpush1.msra.mxu0 %v1864
        %1888 = vmatprep.subr.mxu0 0.0
        %1889 = vmatpush1.msra.mxu0 %v1865
        %1890 = vmatprep.subr.mxu0 0.0
        %1891 = vmatpush1.msra.mxu0 %v1866
        %1892 = vmatprep.subr.mxu0 0.0
        %1893 = vmatpush1.msra.mxu0 %v1867
        %1894 = vmatprep.subr.mxu0 0.0
        %1895 = vmatpush1.msra.mxu0 %v1868
        %1896 = vmatprep.subr.mxu0 0.0
        %1897 = vmatpush1.msra.mxu0 %v1869
        %1898 = vmatprep.subr.mxu0 0.0
        %1899 = vmatpush1.msra.mxu0 %v1870
        %1900 = vmatprep.subr.mxu0 0.0
        %1901 = vmatpush1.msra.mxu0 %v1871
        %1902 = vmatprep.subr.mxu0 0.0
        %1903 = vmatpush1.msra.mxu0 0.0
        %1904 = vmatprep.subr.mxu0 0.0
        %1905 = vmatpush1.msra.mxu0 0.0
        %1906 = vmatprep.subr.mxu0 0.0
        %1907 = vmatpush1.msra.mxu0 0.0
        %1908 = vmatprep.subr.mxu0 0.0
        %1909 = vmatpush1.msra.mxu0 0.0
        %1910 = vmatprep.subr.mxu0 0.0
        %1911 = vmatpush1.msra.mxu0 0.0
        %1912 = vmatprep.subr.mxu0 0.0
        %1913 = vmatpush1.msra.mxu0 0.0
        %1914 = vmatprep.subr.mxu0 0.0
        %1915 = vmatpush1.msra.mxu0 0.0
        %1916 = vmatprep.subr.mxu0 0.0
        %1917 = vmatpush1.msra.mxu0 0.0
        %1918 = vmatprep.subr.mxu0 0.0
        %1919 = vmatpush1.msra.mxu0 0.0
        %1920 = vmatprep.subr.mxu0 0.0
        %1921 = vmatpush1.msra.mxu0 0.0
        %1922 = vmatprep.subr.mxu0 0.0
        %1923 = vmatpush1.msra.mxu0 0.0
        %1924 = vmatprep.subr.mxu0 0.0
        %1925 = vmatpush1.msra.mxu0 0.0
        %1926 = vmatprep.subr.mxu0 0.0
        %1927 = vmatpush1.msra.mxu0 0.0
        %1928 = vmatprep.subr.mxu0 0.0
        %1929 = vmatpush1.msra.mxu0 0.0
        %1930 = vmatprep.subr.mxu0 0.0
        %1931 = vmatpush1.msra.mxu0 0.0
        %1932 = vmatprep.subr.mxu0 0.0
        %1933 = vmatpush1.msra.mxu0 0.0
        %1934 = vmatprep.subr.mxu0 0.0
        %1935 = vmatpush1.msra.mxu0 0.0
        %1936 = vmatprep.subr.mxu0 0.0
        %1937 = vmatpush1.msra.mxu0 0.0
        %1938 = vmatprep.subr.mxu0 0.0
        %1939 = vmatpush1.msra.mxu0 0.0
        %1940 = vmatprep.subr.mxu0 0.0
        %1941 = vmatpush1.msra.mxu0 0.0
        %1942 = vmatprep.subr.mxu0 0.0
        %1943 = vmatpush1.msra.mxu0 0.0
        %1944 = vmatprep.subr.mxu0 0.0
        %1945 = vmatpush1.msra.mxu0 0.0
        %1946 = vmatprep.subr.mxu0 0.0
        %1947 = vmatpush1.msra.mxu0 0.0
        %1948 = vmatprep.subr.mxu0 0.0
        %1949 = vmatpush1.msra.mxu0 0.0
        %1950 = vmatprep.mubr.f32.mxu0 0.0
        %1951 = vmatmul.mubr.f32.gmra.mrb[0].mxu0 %v1881
        %v1952 = vpop.f32.mrb[0].mxu0
        %v1953 = vadd.f32 %v1877, %v1952
        %v1954 = vpop.f32.mrb[0].mxu0
        %1955 = vmatprep.mubr.f32.mxu0 0.0
        %1956 = vmatmul.mubr.f32.gmra.mrb[0].mxu0 %v1884
        %v1957 = vpop.f32.mrb[0].mxu0
        %v1958 = vadd.f32 %v1877, %v1957
        %v1959 = vpop.f32.mrb[0].mxu0
        %1960 = vdwg.mxu0
        %v1961 = vadd.f32 %v1708, %v1953
        %v1962 = vadd.f32 %v1709, %v1958
        %v1963 = vld [vmem:[%s15] sm:$0x1]
        %v1964 = vld [vmem:[%s16] sm:$0x1]
        %v1965 = vsel %vm641, %v1961, 0.0
        %1966 = vadd.xlane.f32.xlu0 %v1965
        %v1967 = vpop.xlane.xlu0 %1966
        %v1968 = vsel %vm641, %v1962, 0.0
        %1969 = vadd.xlane.f32.xlu0 %v1968
        %v1970 = vpop.xlane.xlu0 %1969
        %v1971 = vmul.f32 %v1967, %v648
        %v1972 = vmul.f32 %v1970, %v648
        %v1973 = vsub.f32 %v1961, %v1971
        %v1974 = vsub.f32 %v1962, %v1972
        %v1975 = vmul.f32 %v1973, %v1973
        %v1976 = vmul.f32 %v1974, %v1974
        %v1977 = vsel %vm641, %v1975, 0.0
        %1978 = vadd.xlane.f32.xlu0 %v1977
        %v1979 = vpop.xlane.xlu0 %1978
        %v1980 = vsel %vm641, %v1976, 0.0
        %1981 = vadd.xlane.f32.xlu0 %v1980
        %v1982 = vpop.xlane.xlu0 %1981
        %v1983 = vmul.f32 %v1979, %v648
        %v1984 = vmul.f32 %v1982, %v648
        %v1985 = vadd.f32 %v1983, 1e-06
        %v1986 = vadd.f32 %v1984, 1e-06
        %v1987 = vrsqrt.pop %v1985
        %v1988 = vrsqrt.pop %v1986
        %v1989 = vmul.f32 %v1973, %v1987
        %v1990 = vmul.f32 %v1974, %v1988
        %v1992 = vlaneseq
        %v1993 = vshrl.u32 %v1992, 7
        %v1994 = vsub.s32 0, %v1993
        %v1995 = vrot.slane %v1963, %v1994
        %v1997 = vmul.f32 %v1989, %v1995
        %v1998 = vmul.f32 %v1990, %v1995
        %v2000 = vlaneseq
        %v2001 = vshrl.u32 %v2000, 7
        %v2002 = vsub.s32 0, %v2001
        %v2003 = vrot.slane %v1964, %v2002
        %v2005 = vadd.f32 %v1997, %v2003
        %v2006 = vadd.f32 %v1998, %v2003
        %2007 = vst.msk [vmem:[%s541] sm:$0xff] %vm641, %v2005
        %2008 = vst.msk [vmem:[%s541 + $0x8] sm:$0xff] %vm641, %v2006
        %s2009 = sand.u32 %s401, 1
        %s2010 = scalar_lea.sflag [#allocation3], %s2009
        %s2011 = sand.u32 %s401, 1
        %s2012 = smul.addr %s2011, 16
        %s2013 = scalar_lea.vmem [#allocation2], %s2012
        // Predicated region
        $region89: #{tpu_custom_call.1} parent=87 // pred_check
          %p2014 = pneg %p411
        $region90: #{tpu_custom_call.1} parent=87 // pred_check_branch
          %2016 = sbr.rel (%p2014) target = $region92
        $region91: #{tpu_custom_call.1} parent=87 // pred_region
          %s2018 = ssub.s32 256, 256
          %2019 = vsyncadd %s2010, %s2018
          %s2020 = smul.addr %s31, 2
          %s2021 = smul.addr %s2020, 128
          %s2022 = scalar_lea.hbm %s17, %s2021
          %s2023 = sshll.u32 %s2013, 4
          %s2024 = int_to_ptr.vmem [resolvable:$true] %s2023
          %2029 = dma.vmem_to_hbm [thread:$0]  %s2024, 256, %s2022, %s2010, 128, 128, 8
        $region92: #{tpu_custom_call.1} parent=87 // pred_fallthru
          _
      $region88: #{tpu_custom_call.1} parent=5 // pred_fallthru
        _
      %p2030 = scmp.le.s32.totalorder 2, %s26
      // Predicated region
      $region93: #{tpu_custom_call.1} parent=5 // pred_check
        %p2031 = pneg %p2030
      $region94: #{tpu_custom_call.1} parent=5 // pred_check_branch
        %2033 = sbr.rel (%p2031) target = $region96
      $region95: #{tpu_custom_call.1} parent=5 // pred_region
        %s2034 = ssub.s32 %s26, 2
        // Predicated region
        $region97: #{tpu_custom_call.1} parent=95 // pred_check
          %p2035 = pneg %p417
        $region98: #{tpu_custom_call.1} parent=95 // pred_check_branch
          %2037 = sbr.rel (%p2035) target = $region100
        $region99: #{tpu_custom_call.1} parent=95 // pred_region
          %s2038 = sand.u32 %s402, 1
          %s2039 = scalar_lea.sflag [#allocation3], %s2038
          %s2040 = sand.u32 %s402, 1
          %s2041 = smul.addr %s2040, 16
          %s2042 = scalar_lea.vmem [#allocation2], %s2041
          %2043 = dma.done %s2039, 256
        $region100: #{tpu_custom_call.1} parent=95 // pred_fallthru
          _
      $region96: #{tpu_custom_call.1} parent=5 // pred_fallthru
        _
    $region6: #{tpu_custom_call.1} parent=1 // loop_footer
      %s30 = sadd.s32 1, %s26
    $region7: #{tpu_custom_call.1} parent=1 // loop_footer_branch
      %25 = sbr.rel target = $region3
    $region8: #{tpu_custom_call.1} parent=1 // loop_exit
      _
    %2044 = vsyncpa [#allocation3], 1
    %s2045 = scalar_lea.sflag [#allocation3], 1
    %2046 = vsyncpa %s2045, 1

</llo_original>
